<compile_context>
chip_gen: v5e
topology: v5e:2x2
jax: 0.10.0
libtpu: 0.0.40
codegen_flags: <defaults>
</compile_context>

<pallas_src>
import functools
import math

import jax
import jax.numpy as jnp
from jax.experimental import pallas as pl
from jax.experimental.pallas import tpu as pltpu


# ----------------------------------------------------------------------------
# Fused kernel: one grid step == one batch element.
# ----------------------------------------------------------------------------
def _fused_oligo_kernel(
    si_ref, m_ref, si_fm_ref, m_fm_ref, td_ref,          # per-batch inputs
    si_wqkv_ref, m_wqkv_ref,                              # encoder weights
    w1_si_ref, w1_m_ref, w1_fmsi_ref, w1_fmm_ref, w1_td_ref,  # classifier L1 (segmented)
    b1_ref, w2_ref, b2_ref,                               # classifier L1 bias / L2
    out_ref, si_attn_ref, m_attn_ref,                     # outputs
):
    D = si_wqkv_ref.shape[1] // 3
    H = b1_ref.shape[1]

    def encoder_and_segment(x, wqkv, w1_ref, attn_out_ref):
        # x: (L, V)   wqkv: (V, 3D)   w1_ref: (Lw, D*H) with Lw >= L
        L = x.shape[0]
        qkv = jnp.dot(x, wqkv, preferred_element_type=jnp.float32)          # (L, 3D)
        q = qkv[:, 0:D]
        k = qkv[:, D:2 * D]
        v = qkv[:, 2 * D:3 * D]
        scale = 1.0 / math.sqrt(float(D))
        scores = jnp.dot(q, k.T, preferred_element_type=jnp.float32) * scale  # (L, L)
        s_max = jnp.max(scores, axis=-1, keepdims=True)
        p = jnp.exp(scores - s_max)
        attn = p * pl.reciprocal(jnp.sum(p, axis=-1, keepdims=True), approx=True)
        attn_out_ref[0] = attn                                               # (L, L)

        # classifier first-layer contribution of this segment, no flatten needed:
        #   c[h] = sum_{l,d} enc[l,d] * W1[l*D+d, h]
        #        = sum_d (enc^T @ Wl)[d, d*H + h]      with Wl[l, d*H+h] = W1[l*D+d, h]
        enc_t = jnp.dot(attn, v, preferred_element_type=jnp.float32).T       # (D, L)
        w_seg = w1_ref[pl.ds(0, L), :]                                       # (L, D*H)
        g = jnp.dot(enc_t, w_seg, preferred_element_type=jnp.float32)        # (D, D*H)
        c = g[0:1, 0:H]
        for d in range(1, D):
            c = c + g[d:d + 1, d * H:(d + 1) * H]
        return c                                                             # (1, H)

    c_si = encoder_and_segment(si_ref[0], si_wqkv_ref[...], w1_si_ref, si_attn_ref)
    # mRNA: zero-padding rows (to 57) and the dropped last-2 features contribute
    # nothing, so only the first L_m weight rows are used.
    c_m = encoder_and_segment(m_ref[0], m_wqkv_ref[...], w1_m_ref, m_attn_ref)

    # FM average pooling over the sequence axis -> (1, D_fm)
    fm_si = jnp.sum(si_fm_ref[0], axis=0, keepdims=True) * (1.0 / float(si_fm_ref.shape[1]))
    fm_m = jnp.sum(m_fm_ref[0], axis=0, keepdims=True) * (1.0 / float(m_fm_ref.shape[1]))

    h = (b1_ref[...] + c_si + c_m
         + jnp.dot(fm_si, w1_fmsi_ref[...], preferred_element_type=jnp.float32)
         + jnp.dot(fm_m, w1_fmm_ref[...], preferred_element_type=jnp.float32)
         + jnp.dot(td_ref[0], w1_td_ref[...], preferred_element_type=jnp.float32))
    h = jnp.maximum(h, 0.0)
    logits = jnp.dot(h, w2_ref[...], preferred_element_type=jnp.float32) + b2_ref[...]  # (1, 128)
    out_ref[0] = logits


# ----------------------------------------------------------------------------
# Wrapper: single fused pallas_call, grid over the batch ("parallel" for v7x).
# ----------------------------------------------------------------------------
@functools.partial(jax.jit, static_argnames=("n_out",))
def custom_oligo_forward(params, siRNA, mRNA, siRNA_FM, mRNA_FM, td, *, n_out):
    B, L_si, V = siRNA.shape
    _, L_m, _ = mRNA.shape
    D_fm = siRNA_FM.shape[2]
    TD = td.shape[1]
    D = params["si_wqkv"].shape[1] // 3
    H = params["b1"].shape[1]
    OP = params["w2p"].shape[1]
    if L_m > 57:
        raise ValueError("mRNA length must be <= 57 (classifier expects 57*D-2 mRNA features)")

    td3 = td.reshape(B, 1, TD)

    in_specs = [
        pl.BlockSpec((1, L_si, V), lambda b: (b, 0, 0)),      # siRNA
        pl.BlockSpec((1, L_m, V), lambda b: (b, 0, 0)),       # mRNA
        pl.BlockSpec((1, L_si, D_fm), lambda b: (b, 0, 0)),   # siRNA_FM
        pl.BlockSpec((1, L_m, D_fm), lambda b: (b, 0, 0)),    # mRNA_FM
        pl.BlockSpec((1, 1, TD), lambda b: (b, 0, 0)),        # td
        pl.BlockSpec((V, 3 * D), lambda b: (0, 0)),           # si_wqkv
        pl.BlockSpec((V, 3 * D), lambda b: (0, 0)),           # m_wqkv
        pl.BlockSpec((L_si, D * H), lambda b: (0, 0)),        # w1 siRNA segment
        pl.BlockSpec((57, D * H), lambda b: (0, 0)),          # w1 mRNA segment (padded)
        pl.BlockSpec((D_fm, H), lambda b: (0, 0)),            # w1 siRNA_FM segment
        pl.BlockSpec((D_fm, H), lambda b: (0, 0)),            # w1 mRNA_FM segment
        pl.BlockSpec((TD, H), lambda b: (0, 0)),              # w1 td segment
        pl.BlockSpec((1, H), lambda b: (0, 0)),               # b1
        pl.BlockSpec((H, OP), lambda b: (0, 0)),              # w2 (lane-padded)
        pl.BlockSpec((1, OP), lambda b: (0, 0)),              # b2 (lane-padded)
    ]
    out_specs = [
        pl.BlockSpec((1, 1, OP), lambda b: (b, 0, 0)),        # logits (lane-dense 128)
        pl.BlockSpec((1, L_si, L_si), lambda b: (b, 0, 0)),   # siRNA attention
        pl.BlockSpec((1, L_m, L_m), lambda b: (b, 0, 0)),     # mRNA attention
    ]
    out_shape = (
        jax.ShapeDtypeStruct((B, 1, OP), jnp.float32),
        jax.ShapeDtypeStruct((B, L_si, L_si), jnp.float32),
        jax.ShapeDtypeStruct((B, L_m, L_m), jnp.float32),
    )

    logits, si_attn, m_attn = pl.pallas_call(
        _fused_oligo_kernel,
        grid=(B,),
        in_specs=in_specs,
        out_specs=out_specs,
        out_shape=out_shape,
        compiler_params=pltpu.CompilerParams(dimension_semantics=("parallel",)),
    )(siRNA, mRNA, siRNA_FM, mRNA_FM, td3,
      params["si_wqkv"], params["m_wqkv"],
      params["w1_si_l"], params["w1_m_l"],
      params["w1_fmsi"], params["w1_fmm"], params["w1_td"],
      params["b1"], params["w2p"], params["b2p"])

    x = logits.reshape(B, OP)[:, :n_out]
    return x, si_attn, m_attn


# ----------------------------------------------------------------------------
# Parameters (kernel layout + plain layout for a pure-JAX reference check)
# ----------------------------------------------------------------------------
def init_params(key, *, L_si, V, D, D_fm, TD, H, O, OP=128):
    ks = jax.random.split(key, 10)
    s = 0.1
    si_wqkv = s * jax.random.normal(ks[0], (V, 3 * D), jnp.float32)
    m_wqkv = s * jax.random.normal(ks[1], (V, 3 * D), jnp.float32)
    w1_si = s * jax.random.normal(ks[2], (L_si * D, H), jnp.float32)
    w1_m = s * jax.random.normal(ks[3], (57 * D - 2, H), jnp.float32)
    w1_fmsi = s * jax.random.normal(ks[4], (D_fm, H), jnp.float32)
    w1_fmm = s * jax.random.normal(ks[5], (D_fm, H), jnp.float32)
    w1_td = s * jax.random.normal(ks[6], (TD, H), jnp.float32)
    b1 = s * jax.random.normal(ks[7], (1, H), jnp.float32)
    w2 = s * jax.random.normal(ks[8], (H, O), jnp.float32)
    b2 = s * jax.random.normal(ks[9], (1, O), jnp.float32)

    # mRNA segment: append the 2 "dropped" ([:, :-2]) rows as zeros, then repack.
    w1_m_pad = jnp.concatenate([w1_m, jnp.zeros((2, H), jnp.float32)], axis=0)

    kernel_params = {
        "si_wqkv": si_wqkv,
        "m_wqkv": m_wqkv,
        "w1_si_l": w1_si.reshape(L_si, D * H),    # Wl[l, d*H+h] == w1_si[l*D+d, h]
        "w1_m_l": w1_m_pad.reshape(57, D * H),
        "w1_fmsi": w1_fmsi,
        "w1_fmm": w1_fmm,
        "w1_td": w1_td,
        "b1": b1,
        "w2p": jnp.concatenate([w2, jnp.zeros((H, OP - O), jnp.float32)], axis=1),
        "b2p": jnp.concatenate([b2, jnp.zeros((1, OP - O), jnp.float32)], axis=1),
    }
    ref_params = {
        "si_wqkv": si_wqkv,
        "m_wqkv": m_wqkv,
        "w1_full": jnp.concatenate([w1_si, w1_m, w1_fmsi, w1_fmm, w1_td], axis=0),
        "b1": b1,
        "w2": w2,
        "b2": b2,
    }
    return kernel_params, ref_params


def reference_forward(ref_params, siRNA, mRNA, siRNA_FM, mRNA_FM, td):
    """Plain-JAX mirror of the PyTorch forward (for a numerical self-check)."""
    D = ref_params["si_wqkv"].shape[1] // 3

    def encode(x, wqkv):
        q = x @ wqkv[:, 0:D]
        k = x @ wqkv[:, D:2 * D]
        v = x @ wqkv[:, 2 * D:3 * D]
        s = jnp.einsum("bld,bmd->blm", q, k) / math.sqrt(float(D))
        a = jax.nn.softmax(s, axis=-1)
        return jnp.einsum("blm,bmd->bld", a, v), a

    si_enc, si_attn = encode(siRNA, ref_params["si_wqkv"])
    m_enc, m_attn = encode(mRNA, ref_params["m_wqkv"])
    B = siRNA.shape[0]
    if m_enc.shape[1] < 57:
        pad = 57 - m_enc.shape[1]
        m_enc = jnp.concatenate(
            [m_enc, jnp.zeros((B, pad, m_enc.shape[2]), m_enc.dtype)], axis=1)
    si_fm = jnp.mean(siRNA_FM, axis=1)
    m_fm = jnp.mean(mRNA_FM, axis=1)
    merge = jnp.concatenate(
        [si_enc.reshape(B, -1), m_enc.reshape(B, -1)[:, :-2], si_fm, m_fm, td.reshape(B, -1)],
        axis=-1)
    h = jnp.maximum(merge @ ref_params["w1_full"] + ref_params["b1"], 0.0)
    x = h @ ref_params["w2"] + ref_params["b2"]
    return x, si_attn, m_attn


# ----------------------------------------------------------------------------
# Demo
# ----------------------------------------------------------------------------
if __name__ == "__main__":
    B = 2           # batch
    L_si = 19       # siRNA length
    L_m = 50        # mRNA length (< 57 -> exercises the padding branch)
    V = 5           # per-position input features
    D = 16          # encoder model dim
    D_fm = 32       # foundation-model embedding dim
    TD = 24         # thermodynamic feature dim
    H = 64          # classifier hidden dim
    O = 2           # classifier output dim

    key = jax.random.PRNGKey(0)
    k_in, k_par = jax.random.split(key)
    ki = jax.random.split(k_in, 5)
    siRNA = jax.random.normal(ki[0], (B, L_si, V), jnp.float32)
    mRNA = jax.random.normal(ki[1], (B, L_m, V), jnp.float32)
    siRNA_FM = jax.random.normal(ki[2], (B, L_si, D_fm), jnp.float32)
    mRNA_FM = jax.random.normal(ki[3], (B, L_m, D_fm), jnp.float32)
    td = jax.random.normal(ki[4], (B, TD), jnp.float32)

    kparams, rparams = init_params(k_par, L_si=L_si, V=V, D=D, D_fm=D_fm, TD=TD, H=H, O=O)

    x, si_attn, m_attn = custom_oligo_forward(
        kparams, siRNA, mRNA, siRNA_FM, mRNA_FM, td, n_out=O)
    jax.block_until_ready((x, si_attn, m_attn))

    assert x.shape == (B, O)
    assert si_attn.shape == (B, L_si, L_si)
    assert m_attn.shape == (B, L_m, L_m)

    # numerical self-check against the plain-JAX reference forward
    x_r, si_r, m_r = reference_forward(rparams, siRNA, mRNA, siRNA_FM, mRNA_FM, td)

    def _max_abs_diff(a, b):
        return float(jnp.max(jnp.abs(a - b)))

    assert _max_abs_diff(si_attn, si_r) < 1e-2, "siRNA attention mismatch"
    assert _max_abs_diff(m_attn, m_r) < 1e-2, "mRNA attention mismatch"
    assert _max_abs_diff(x, x_r) < 3e-2, "classifier output mismatch"

    print("KERNEL_OK")
</pallas_src>

<mosaic_0001>
module attributes {stable_mosaic.version = 11 : i64} {
  func.func @_fused_oligo_kernel(%arg0: i32, %arg1: memref<1x19x5xf32, #tpu.memory_space<vmem>>, %arg2: memref<1x50x5xf32, #tpu.memory_space<vmem>>, %arg3: memref<1x19x32xf32, #tpu.memory_space<vmem>>, %arg4: memref<1x50x32xf32, #tpu.memory_space<vmem>>, %arg5: memref<1x1x24xf32, #tpu.memory_space<vmem>>, %arg6: memref<5x48xf32, #tpu.memory_space<vmem>>, %arg7: memref<5x48xf32, #tpu.memory_space<vmem>>, %arg8: memref<19x1024xf32, #tpu.memory_space<vmem>>, %arg9: memref<57x1024xf32, #tpu.memory_space<vmem>>, %arg10: memref<32x64xf32, #tpu.memory_space<vmem>>, %arg11: memref<32x64xf32, #tpu.memory_space<vmem>>, %arg12: memref<24x64xf32, #tpu.memory_space<vmem>>, %arg13: memref<1x64xf32, #tpu.memory_space<vmem>>, %arg14: memref<64x128xf32, #tpu.memory_space<vmem>>, %arg15: memref<1x128xf32, #tpu.memory_space<vmem>>, %arg16: memref<1x1x128xf32, #tpu.memory_space<vmem>>, %arg17: memref<1x19x19xf32, #tpu.memory_space<vmem>>, %arg18: memref<1x50x50xf32, #tpu.memory_space<vmem>>) attributes {dimension_semantics = [#tpu.dimension_semantics<parallel>], iteration_bounds = array<i64: 2>, scalar_prefetch = 0 : i64, scratch_operands = 0 : i64, tpu.core_type = #tpu.core_type<tc>, window_params = [{transform_indices = @transform_0, window_bounds = array<i64: 1, 19, 5>}, {transform_indices = @transform_1, window_bounds = array<i64: 1, 50, 5>}, {transform_indices = @transform_2, window_bounds = array<i64: 1, 19, 32>}, {transform_indices = @transform_3, window_bounds = array<i64: 1, 50, 32>}, {transform_indices = @transform_4, window_bounds = array<i64: 1, 1, 24>}, {pipeline_mode = #tpu.pipeline_mode<synchronous>, transform_indices = @transform_5, window_bounds = array<i64: 5, 48>}, {pipeline_mode = #tpu.pipeline_mode<synchronous>, transform_indices = @transform_6, window_bounds = array<i64: 5, 48>}, {pipeline_mode = #tpu.pipeline_mode<synchronous>, transform_indices = @transform_7, window_bounds = array<i64: 19, 1024>}, {pipeline_mode = #tpu.pipeline_mode<synchronous>, transform_indices = @transform_8, window_bounds = array<i64: 57, 1024>}, {pipeline_mode = #tpu.pipeline_mode<synchronous>, transform_indices = @transform_9, window_bounds = array<i64: 32, 64>}, {pipeline_mode = #tpu.pipeline_mode<synchronous>, transform_indices = @transform_10, window_bounds = array<i64: 32, 64>}, {pipeline_mode = #tpu.pipeline_mode<synchronous>, transform_indices = @transform_11, window_bounds = array<i64: 24, 64>}, {pipeline_mode = #tpu.pipeline_mode<synchronous>, transform_indices = @transform_12, window_bounds = array<i64: 1, 64>}, {pipeline_mode = #tpu.pipeline_mode<synchronous>, transform_indices = @transform_13, window_bounds = array<i64: 64, 128>}, {pipeline_mode = #tpu.pipeline_mode<synchronous>, transform_indices = @transform_14, window_bounds = array<i64: 1, 128>}, {transform_indices = @transform_15, window_bounds = array<i64: 1, 1, 128>}, {transform_indices = @transform_16, window_bounds = array<i64: 1, 19, 19>}, {transform_indices = @transform_17, window_bounds = array<i64: 1, 50, 50>}]} {
    %c0 = arith.constant 0 : index
    %c0_0 = arith.constant 0 : index
    %c0_1 = arith.constant 0 : index
    %0 = vector.load %arg1[%c0, %c0_0, %c0_1] : memref<1x19x5xf32, #tpu.memory_space<vmem>>, vector<1x19x5xf32>
    %1 = vector.shape_cast %0 : vector<1x19x5xf32> to vector<19x5xf32>
    %c0_2 = arith.constant 0 : index
    %c0_3 = arith.constant 0 : index
    %2 = vector.load %arg6[%c0_2, %c0_3] : memref<5x48xf32, #tpu.memory_space<vmem>>, vector<5x48xf32>
    %cst = arith.constant dense<0.000000e+00> : vector<19x48xf32>
    %3 = tpu.matmul %1, %2, %cst {dimension_numbers = #tpu.dot_dimension_numbers<[1], [0], [0], [1], [0, 0, 1, 1], [], []>} : vector<19x5xf32>, vector<5x48xf32>, vector<19x48xf32> -> vector<19x48xf32>
    %4 = vector.extract_strided_slice %3 {offsets = [0, 0], sizes = [19, 16], strides = [1, 1]} : vector<19x48xf32> to vector<19x16xf32>
    %5 = vector.extract_strided_slice %3 {offsets = [0, 16], sizes = [19, 16], strides = [1, 1]} : vector<19x48xf32> to vector<19x16xf32>
    %6 = vector.extract_strided_slice %3 {offsets = [0, 32], sizes = [19, 16], strides = [1, 1]} : vector<19x48xf32> to vector<19x16xf32>
    %7 = tpu.transpose %5, [1, 0] : vector<19x16xf32> -> vector<16x19xf32>
    %cst_4 = arith.constant dense<0.000000e+00> : vector<19x19xf32>
    %8 = tpu.matmul %4, %7, %cst_4 {dimension_numbers = #tpu.dot_dimension_numbers<[1], [0], [0], [1], [0, 0, 1, 1], [], []>} : vector<19x16xf32>, vector<16x19xf32>, vector<19x19xf32> -> vector<19x19xf32>
    %cst_5 = arith.constant 2.500000e-01 : f32
    %9 = vector.broadcast %cst_5 : f32 to vector<19x19xf32>
    %10 = arith.mulf %8, %9 : vector<19x19xf32>
    %cst_6 = arith.constant dense<0xFF800000> : vector<19xf32>
    %11 = vector.multi_reduction <maximumf>, %10, %cst_6 [1] : vector<19x19xf32> to vector<19xf32>
    %12 = vector.shape_cast %11 : vector<19xf32> to vector<19x1xf32>
    %13 = vector.broadcast %12 : vector<19x1xf32> to vector<19x19xf32>
    %14 = arith.subf %10, %13 : vector<19x19xf32>
    %15 = math.exp %14 : vector<19x19xf32>
    %cst_7 = arith.constant dense<0.000000e+00> : vector<19xf32>
    %16 = vector.multi_reduction <add>, %15, %cst_7 [1] : vector<19x19xf32> to vector<19xf32>
    %17 = vector.shape_cast %16 : vector<19xf32> to vector<19x1xf32>
    %18 = tpu.reciprocal %17 {approx = true} : vector<19x1xf32> -> vector<19x1xf32>
    %19 = vector.broadcast %18 : vector<19x1xf32> to vector<19x19xf32>
    %20 = arith.mulf %15, %19 : vector<19x19xf32>
    %c0_8 = arith.constant 0 : index
    %c0_9 = arith.constant 0 : index
    %c0_10 = arith.constant 0 : index
    %21 = vector.load %arg17[%c0_8, %c0_9, %c0_10] : memref<1x19x19xf32, #tpu.memory_space<vmem>>, vector<1x19x19xf32>
    %22 = vector.shape_cast %21 : vector<1x19x19xf32> to vector<19x19xf32>
    %23 = vector.shape_cast %20 : vector<19x19xf32> to vector<1x19x19xf32>
    tpu.vector_store %arg17[%c0_8, %c0_9, %c0_10], %23 {strides = array<i32>} : memref<1x19x19xf32, #tpu.memory_space<vmem>>, vector<1x19x19xf32>,
    %cst_11 = arith.constant dense<0.000000e+00> : vector<19x16xf32>
    %24 = tpu.matmul %20, %6, %cst_11 {dimension_numbers = #tpu.dot_dimension_numbers<[1], [0], [0], [1], [0, 0, 1, 1], [], []>} : vector<19x19xf32>, vector<19x16xf32>, vector<19x16xf32> -> vector<19x16xf32>
    %25 = tpu.transpose %24, [1, 0] : vector<19x16xf32> -> vector<16x19xf32>
    %c0_12 = arith.constant 0 : index
    %c0_13 = arith.constant 0 : index
    %26 = vector.load %arg8[%c0_12, %c0_13] : memref<19x1024xf32, #tpu.memory_space<vmem>>, vector<19x1024xf32>
    %cst_14 = arith.constant dense<0.000000e+00> : vector<16x1024xf32>
    %27 = tpu.matmul %25, %26, %cst_14 {dimension_numbers = #tpu.dot_dimension_numbers<[1], [0], [0], [1], [0, 0, 1, 1], [], []>} : vector<16x19xf32>, vector<19x1024xf32>, vector<16x1024xf32> -> vector<16x1024xf32>
    %28 = vector.extract_strided_slice %27 {offsets = [0, 0], sizes = [1, 64], strides = [1, 1]} : vector<16x1024xf32> to vector<1x64xf32>
    %29 = vector.extract_strided_slice %27 {offsets = [1, 64], sizes = [1, 64], strides = [1, 1]} : vector<16x1024xf32> to vector<1x64xf32>
    %30 = arith.addf %28, %29 : vector<1x64xf32>
    %31 = vector.extract_strided_slice %27 {offsets = [2, 128], sizes = [1, 64], strides = [1, 1]} : vector<16x1024xf32> to vector<1x64xf32>
    %32 = arith.addf %30, %31 : vector<1x64xf32>
    %33 = vector.extract_strided_slice %27 {offsets = [3, 192], sizes = [1, 64], strides = [1, 1]} : vector<16x1024xf32> to vector<1x64xf32>
    %34 = arith.addf %32, %33 : vector<1x64xf32>
    %35 = vector.extract_strided_slice %27 {offsets = [4, 256], sizes = [1, 64], strides = [1, 1]} : vector<16x1024xf32> to vector<1x64xf32>
    %36 = arith.addf %34, %35 : vector<1x64xf32>
    %37 = vector.extract_strided_slice %27 {offsets = [5, 320], sizes = [1, 64], strides = [1, 1]} : vector<16x1024xf32> to vector<1x64xf32>
    %38 = arith.addf %36, %37 : vector<1x64xf32>
    %39 = vector.extract_strided_slice %27 {offsets = [6, 384], sizes = [1, 64], strides = [1, 1]} : vector<16x1024xf32> to vector<1x64xf32>
    %40 = arith.addf %38, %39 : vector<1x64xf32>
    %41 = vector.extract_strided_slice %27 {offsets = [7, 448], sizes = [1, 64], strides = [1, 1]} : vector<16x1024xf32> to vector<1x64xf32>
    %42 = arith.addf %40, %41 : vector<1x64xf32>
    %43 = vector.extract_strided_slice %27 {offsets = [8, 512], sizes = [1, 64], strides = [1, 1]} : vector<16x1024xf32> to vector<1x64xf32>
    %44 = arith.addf %42, %43 : vector<1x64xf32>
    %45 = vector.extract_strided_slice %27 {offsets = [9, 576], sizes = [1, 64], strides = [1, 1]} : vector<16x1024xf32> to vector<1x64xf32>
    %46 = arith.addf %44, %45 : vector<1x64xf32>
    %47 = vector.extract_strided_slice %27 {offsets = [10, 640], sizes = [1, 64], strides = [1, 1]} : vector<16x1024xf32> to vector<1x64xf32>
    %48 = arith.addf %46, %47 : vector<1x64xf32>
    %49 = vector.extract_strided_slice %27 {offsets = [11, 704], sizes = [1, 64], strides = [1, 1]} : vector<16x1024xf32> to vector<1x64xf32>
    %50 = arith.addf %48, %49 : vector<1x64xf32>
    %51 = vector.extract_strided_slice %27 {offsets = [12, 768], sizes = [1, 64], strides = [1, 1]} : vector<16x1024xf32> to vector<1x64xf32>
    %52 = arith.addf %50, %51 : vector<1x64xf32>
    %53 = vector.extract_strided_slice %27 {offsets = [13, 832], sizes = [1, 64], strides = [1, 1]} : vector<16x1024xf32> to vector<1x64xf32>
    %54 = arith.addf %52, %53 : vector<1x64xf32>
    %55 = vector.extract_strided_slice %27 {offsets = [14, 896], sizes = [1, 64], strides = [1, 1]} : vector<16x1024xf32> to vector<1x64xf32>
    %56 = arith.addf %54, %55 : vector<1x64xf32>
    %57 = vector.extract_strided_slice %27 {offsets = [15, 960], sizes = [1, 64], strides = [1, 1]} : vector<16x1024xf32> to vector<1x64xf32>
    %58 = arith.addf %56, %57 : vector<1x64xf32>
    %c0_15 = arith.constant 0 : index
    %c0_16 = arith.constant 0 : index
    %c0_17 = arith.constant 0 : index
    %59 = vector.load %arg2[%c0_15, %c0_16, %c0_17] : memref<1x50x5xf32, #tpu.memory_space<vmem>>, vector<1x50x5xf32>
    %60 = vector.shape_cast %59 : vector<1x50x5xf32> to vector<50x5xf32>
    %c0_18 = arith.constant 0 : index
    %c0_19 = arith.constant 0 : index
    %61 = vector.load %arg7[%c0_18, %c0_19] : memref<5x48xf32, #tpu.memory_space<vmem>>, vector<5x48xf32>
    %cst_20 = arith.constant dense<0.000000e+00> : vector<50x48xf32>
    %62 = tpu.matmul %60, %61, %cst_20 {dimension_numbers = #tpu.dot_dimension_numbers<[1], [0], [0], [1], [0, 0, 1, 1], [], []>} : vector<50x5xf32>, vector<5x48xf32>, vector<50x48xf32> -> vector<50x48xf32>
    %63 = vector.extract_strided_slice %62 {offsets = [0, 0], sizes = [50, 16], strides = [1, 1]} : vector<50x48xf32> to vector<50x16xf32>
    %64 = vector.extract_strided_slice %62 {offsets = [0, 16], sizes = [50, 16], strides = [1, 1]} : vector<50x48xf32> to vector<50x16xf32>
    %65 = vector.extract_strided_slice %62 {offsets = [0, 32], sizes = [50, 16], strides = [1, 1]} : vector<50x48xf32> to vector<50x16xf32>
    %66 = tpu.transpose %64, [1, 0] : vector<50x16xf32> -> vector<16x50xf32>
    %cst_21 = arith.constant dense<0.000000e+00> : vector<50x50xf32>
    %67 = tpu.matmul %63, %66, %cst_21 {dimension_numbers = #tpu.dot_dimension_numbers<[1], [0], [0], [1], [0, 0, 1, 1], [], []>} : vector<50x16xf32>, vector<16x50xf32>, vector<50x50xf32> -> vector<50x50xf32>
    %cst_22 = arith.constant 2.500000e-01 : f32
    %68 = vector.broadcast %cst_22 : f32 to vector<50x50xf32>
    %69 = arith.mulf %67, %68 : vector<50x50xf32>
    %cst_23 = arith.constant dense<0xFF800000> : vector<50xf32>
    %70 = vector.multi_reduction <maximumf>, %69, %cst_23 [1] : vector<50x50xf32> to vector<50xf32>
    %71 = vector.shape_cast %70 : vector<50xf32> to vector<50x1xf32>
    %72 = vector.broadcast %71 : vector<50x1xf32> to vector<50x50xf32>
    %73 = arith.subf %69, %72 : vector<50x50xf32>
    %74 = math.exp %73 : vector<50x50xf32>
    %cst_24 = arith.constant dense<0.000000e+00> : vector<50xf32>
    %75 = vector.multi_reduction <add>, %74, %cst_24 [1] : vector<50x50xf32> to vector<50xf32>
    %76 = vector.shape_cast %75 : vector<50xf32> to vector<50x1xf32>
    %77 = tpu.reciprocal %76 {approx = true} : vector<50x1xf32> -> vector<50x1xf32>
    %78 = vector.broadcast %77 : vector<50x1xf32> to vector<50x50xf32>
    %79 = arith.mulf %74, %78 : vector<50x50xf32>
    %c0_25 = arith.constant 0 : index
    %c0_26 = arith.constant 0 : index
    %c0_27 = arith.constant 0 : index
    %80 = vector.load %arg18[%c0_25, %c0_26, %c0_27] : memref<1x50x50xf32, #tpu.memory_space<vmem>>, vector<1x50x50xf32>
    %81 = vector.shape_cast %80 : vector<1x50x50xf32> to vector<50x50xf32>
    %82 = vector.shape_cast %79 : vector<50x50xf32> to vector<1x50x50xf32>
    tpu.vector_store %arg18[%c0_25, %c0_26, %c0_27], %82 {strides = array<i32>} : memref<1x50x50xf32, #tpu.memory_space<vmem>>, vector<1x50x50xf32>,
    %cst_28 = arith.constant dense<0.000000e+00> : vector<50x16xf32>
    %83 = tpu.matmul %79, %65, %cst_28 {dimension_numbers = #tpu.dot_dimension_numbers<[1], [0], [0], [1], [0, 0, 1, 1], [], []>} : vector<50x50xf32>, vector<50x16xf32>, vector<50x16xf32> -> vector<50x16xf32>
    %84 = tpu.transpose %83, [1, 0] : vector<50x16xf32> -> vector<16x50xf32>
    %c0_29 = arith.constant 0 : index
    %c0_30 = arith.constant 0 : index
    %85 = vector.load %arg9[%c0_29, %c0_30] : memref<57x1024xf32, #tpu.memory_space<vmem>>, vector<50x1024xf32>
    %cst_31 = arith.constant dense<0.000000e+00> : vector<16x1024xf32>
    %86 = tpu.matmul %84, %85, %cst_31 {dimension_numbers = #tpu.dot_dimension_numbers<[1], [0], [0], [1], [0, 0, 1, 1], [], []>} : vector<16x50xf32>, vector<50x1024xf32>, vector<16x1024xf32> -> vector<16x1024xf32>
    %87 = vector.extract_strided_slice %86 {offsets = [0, 0], sizes = [1, 64], strides = [1, 1]} : vector<16x1024xf32> to vector<1x64xf32>
    %88 = vector.extract_strided_slice %86 {offsets = [1, 64], sizes = [1, 64], strides = [1, 1]} : vector<16x1024xf32> to vector<1x64xf32>
    %89 = arith.addf %87, %88 : vector<1x64xf32>
    %90 = vector.extract_strided_slice %86 {offsets = [2, 128], sizes = [1, 64], strides = [1, 1]} : vector<16x1024xf32> to vector<1x64xf32>
    %91 = arith.addf %89, %90 : vector<1x64xf32>
    %92 = vector.extract_strided_slice %86 {offsets = [3, 192], sizes = [1, 64], strides = [1, 1]} : vector<16x1024xf32> to vector<1x64xf32>
    %93 = arith.addf %91, %92 : vector<1x64xf32>
    %94 = vector.extract_strided_slice %86 {offsets = [4, 256], sizes = [1, 64], strides = [1, 1]} : vector<16x1024xf32> to vector<1x64xf32>
    %95 = arith.addf %93, %94 : vector<1x64xf32>
    %96 = vector.extract_strided_slice %86 {offsets = [5, 320], sizes = [1, 64], strides = [1, 1]} : vector<16x1024xf32> to vector<1x64xf32>
    %97 = arith.addf %95, %96 : vector<1x64xf32>
    %98 = vector.extract_strided_slice %86 {offsets = [6, 384], sizes = [1, 64], strides = [1, 1]} : vector<16x1024xf32> to vector<1x64xf32>
    %99 = arith.addf %97, %98 : vector<1x64xf32>
    %100 = vector.extract_strided_slice %86 {offsets = [7, 448], sizes = [1, 64], strides = [1, 1]} : vector<16x1024xf32> to vector<1x64xf32>
    %101 = arith.addf %99, %100 : vector<1x64xf32>
    %102 = vector.extract_strided_slice %86 {offsets = [8, 512], sizes = [1, 64], strides = [1, 1]} : vector<16x1024xf32> to vector<1x64xf32>
    %103 = arith.addf %101, %102 : vector<1x64xf32>
    %104 = vector.extract_strided_slice %86 {offsets = [9, 576], sizes = [1, 64], strides = [1, 1]} : vector<16x1024xf32> to vector<1x64xf32>
    %105 = arith.addf %103, %104 : vector<1x64xf32>
    %106 = vector.extract_strided_slice %86 {offsets = [10, 640], sizes = [1, 64], strides = [1, 1]} : vector<16x1024xf32> to vector<1x64xf32>
    %107 = arith.addf %105, %106 : vector<1x64xf32>
    %108 = vector.extract_strided_slice %86 {offsets = [11, 704], sizes = [1, 64], strides = [1, 1]} : vector<16x1024xf32> to vector<1x64xf32>
    %109 = arith.addf %107, %108 : vector<1x64xf32>
    %110 = vector.extract_strided_slice %86 {offsets = [12, 768], sizes = [1, 64], strides = [1, 1]} : vector<16x1024xf32> to vector<1x64xf32>
    %111 = arith.addf %109, %110 : vector<1x64xf32>
    %112 = vector.extract_strided_slice %86 {offsets = [13, 832], sizes = [1, 64], strides = [1, 1]} : vector<16x1024xf32> to vector<1x64xf32>
    %113 = arith.addf %111, %112 : vector<1x64xf32>
    %114 = vector.extract_strided_slice %86 {offsets = [14, 896], sizes = [1, 64], strides = [1, 1]} : vector<16x1024xf32> to vector<1x64xf32>
    %115 = arith.addf %113, %114 : vector<1x64xf32>
    %116 = vector.extract_strided_slice %86 {offsets = [15, 960], sizes = [1, 64], strides = [1, 1]} : vector<16x1024xf32> to vector<1x64xf32>
    %117 = arith.addf %115, %116 : vector<1x64xf32>
    %c0_32 = arith.constant 0 : index
    %c0_33 = arith.constant 0 : index
    %c0_34 = arith.constant 0 : index
    %118 = vector.load %arg3[%c0_32, %c0_33, %c0_34] : memref<1x19x32xf32, #tpu.memory_space<vmem>>, vector<1x19x32xf32>
    %119 = vector.shape_cast %118 : vector<1x19x32xf32> to vector<19x32xf32>
    %cst_35 = arith.constant dense<0.000000e+00> : vector<32xf32>
    %120 = vector.multi_reduction <add>, %119, %cst_35 [0] : vector<19x32xf32> to vector<32xf32>
    %121 = vector.shape_cast %120 : vector<32xf32> to vector<1x32xf32>
    %cst_36 = arith.constant 0.0526315793 : f32
    %122 = vector.broadcast %cst_36 : f32 to vector<1x32xf32>
    %123 = arith.mulf %121, %122 : vector<1x32xf32>
    %c0_37 = arith.constant 0 : index
    %c0_38 = arith.constant 0 : index
    %c0_39 = arith.constant 0 : index
    %124 = vector.load %arg4[%c0_37, %c0_38, %c0_39] : memref<1x50x32xf32, #tpu.memory_space<vmem>>, vector<1x50x32xf32>
    %125 = vector.shape_cast %124 : vector<1x50x32xf32> to vector<50x32xf32>
    %cst_40 = arith.constant dense<0.000000e+00> : vector<32xf32>
    %126 = vector.multi_reduction <add>, %125, %cst_40 [0] : vector<50x32xf32> to vector<32xf32>
    %127 = vector.shape_cast %126 : vector<32xf32> to vector<1x32xf32>
    %cst_41 = arith.constant 2.000000e-02 : f32
    %128 = vector.broadcast %cst_41 : f32 to vector<1x32xf32>
    %129 = arith.mulf %127, %128 : vector<1x32xf32>
    %c0_42 = arith.constant 0 : index
    %c0_43 = arith.constant 0 : index
    %130 = vector.load %arg13[%c0_42, %c0_43] : memref<1x64xf32, #tpu.memory_space<vmem>>, vector<1x64xf32>
    %131 = arith.addf %130, %58 : vector<1x64xf32>
    %132 = arith.addf %131, %117 : vector<1x64xf32>
    %c0_44 = arith.constant 0 : index
    %c0_45 = arith.constant 0 : index
    %133 = vector.load %arg10[%c0_44, %c0_45] : memref<32x64xf32, #tpu.memory_space<vmem>>, vector<32x64xf32>
    %cst_46 = arith.constant dense<0.000000e+00> : vector<1x64xf32>
    %134 = tpu.matmul %123, %133, %cst_46 {dimension_numbers = #tpu.dot_dimension_numbers<[1], [0], [0], [1], [0, 0, 1, 1], [], []>} : vector<1x32xf32>, vector<32x64xf32>, vector<1x64xf32> -> vector<1x64xf32>
    %135 = arith.addf %132, %134 : vector<1x64xf32>
    %c0_47 = arith.constant 0 : index
    %c0_48 = arith.constant 0 : index
    %136 = vector.load %arg11[%c0_47, %c0_48] : memref<32x64xf32, #tpu.memory_space<vmem>>, vector<32x64xf32>
    %cst_49 = arith.constant dense<0.000000e+00> : vector<1x64xf32>
    %137 = tpu.matmul %129, %136, %cst_49 {dimension_numbers = #tpu.dot_dimension_numbers<[1], [0], [0], [1], [0, 0, 1, 1], [], []>} : vector<1x32xf32>, vector<32x64xf32>, vector<1x64xf32> -> vector<1x64xf32>
    %138 = arith.addf %135, %137 : vector<1x64xf32>
    %c0_50 = arith.constant 0 : index
    %c0_51 = arith.constant 0 : index
    %c0_52 = arith.constant 0 : index
    %139 = vector.load %arg5[%c0_50, %c0_51, %c0_52] : memref<1x1x24xf32, #tpu.memory_space<vmem>>, vector<1x1x24xf32>
    %140 = vector.shape_cast %139 : vector<1x1x24xf32> to vector<1x24xf32>
    %c0_53 = arith.constant 0 : index
    %c0_54 = arith.constant 0 : index
    %141 = vector.load %arg12[%c0_53, %c0_54] : memref<24x64xf32, #tpu.memory_space<vmem>>, vector<24x64xf32>
    %cst_55 = arith.constant dense<0.000000e+00> : vector<1x64xf32>
    %142 = tpu.matmul %140, %141, %cst_55 {dimension_numbers = #tpu.dot_dimension_numbers<[1], [0], [0], [1], [0, 0, 1, 1], [], []>} : vector<1x24xf32>, vector<24x64xf32>, vector<1x64xf32> -> vector<1x64xf32>
    %143 = arith.addf %138, %142 : vector<1x64xf32>
    %cst_56 = arith.constant 0.000000e+00 : f32
    %144 = vector.broadcast %cst_56 : f32 to vector<1x64xf32>
    %145 = arith.maximumf %143, %144 : vector<1x64xf32>
    %c0_57 = arith.constant 0 : index
    %c0_58 = arith.constant 0 : index
    %146 = vector.load %arg14[%c0_57, %c0_58] : memref<64x128xf32, #tpu.memory_space<vmem>>, vector<64x128xf32>
    %cst_59 = arith.constant dense<0.000000e+00> : vector<1x128xf32>
    %147 = tpu.matmul %145, %146, %cst_59 {dimension_numbers = #tpu.dot_dimension_numbers<[1], [0], [0], [1], [0, 0, 1, 1], [], []>} : vector<1x64xf32>, vector<64x128xf32>, vector<1x128xf32> -> vector<1x128xf32>
    %c0_60 = arith.constant 0 : index
    %c0_61 = arith.constant 0 : index
    %148 = vector.load %arg15[%c0_60, %c0_61] : memref<1x128xf32, #tpu.memory_space<vmem>>, vector<1x128xf32>
    %149 = arith.addf %147, %148 : vector<1x128xf32>
    %c0_62 = arith.constant 0 : index
    %c0_63 = arith.constant 0 : index
    %c0_64 = arith.constant 0 : index
    %150 = vector.load %arg16[%c0_62, %c0_63, %c0_64] : memref<1x1x128xf32, #tpu.memory_space<vmem>>, vector<1x1x128xf32>
    %151 = vector.shape_cast %150 : vector<1x1x128xf32> to vector<1x128xf32>
    %152 = vector.shape_cast %149 : vector<1x128xf32> to vector<1x1x128xf32>
    tpu.vector_store %arg16[%c0_62, %c0_63, %c0_64], %152 {strides = array<i32>} : memref<1x1x128xf32, #tpu.memory_space<vmem>>, vector<1x1x128xf32>,
    return
  }
  func.func @transform_0(%arg0: i32) -> (i32, i32, i32) {
    %c0_i32 = arith.constant 0 : i32
    %c0_i32_0 = arith.constant 0 : i32
    %c0_i32_1 = arith.constant 0 : i32
    return %arg0, %c0_i32, %c0_i32_0 : i32, i32, i32
  }
  func.func @transform_1(%arg0: i32) -> (i32, i32, i32) {
    %c0_i32 = arith.constant 0 : i32
    %c0_i32_0 = arith.constant 0 : i32
    %c0_i32_1 = arith.constant 0 : i32
    return %arg0, %c0_i32, %c0_i32_0 : i32, i32, i32
  }
  func.func @transform_2(%arg0: i32) -> (i32, i32, i32) {
    %c0_i32 = arith.constant 0 : i32
    %c0_i32_0 = arith.constant 0 : i32
    %c0_i32_1 = arith.constant 0 : i32
    return %arg0, %c0_i32, %c0_i32_0 : i32, i32, i32
  }
  func.func @transform_3(%arg0: i32) -> (i32, i32, i32) {
    %c0_i32 = arith.constant 0 : i32
    %c0_i32_0 = arith.constant 0 : i32
    %c0_i32_1 = arith.constant 0 : i32
    return %arg0, %c0_i32, %c0_i32_0 : i32, i32, i32
  }
  func.func @transform_4(%arg0: i32) -> (i32, i32, i32) {
    %c0_i32 = arith.constant 0 : i32
    %c0_i32_0 = arith.constant 0 : i32
    %c0_i32_1 = arith.constant 0 : i32
    return %arg0, %c0_i32, %c0_i32_0 : i32, i32, i32
  }
  func.func @transform_5(%arg0: i32) -> (i32, i32) {
    %c0_i32 = arith.constant 0 : i32
    %c0_i32_0 = arith.constant 0 : i32
    %c0_i32_1 = arith.constant 0 : i32
    return %c0_i32, %c0_i32_0 : i32, i32
  }
  func.func @transform_6(%arg0: i32) -> (i32, i32) {
    %c0_i32 = arith.constant 0 : i32
    %c0_i32_0 = arith.constant 0 : i32
    %c0_i32_1 = arith.constant 0 : i32
    return %c0_i32, %c0_i32_0 : i32, i32
  }
  func.func @transform_7(%arg0: i32) -> (i32, i32) {
    %c0_i32 = arith.constant 0 : i32
    %c0_i32_0 = arith.constant 0 : i32
    %c0_i32_1 = arith.constant 0 : i32
    return %c0_i32, %c0_i32_0 : i32, i32
  }
  func.func @transform_8(%arg0: i32) -> (i32, i32) {
    %c0_i32 = arith.constant 0 : i32
    %c0_i32_0 = arith.constant 0 : i32
    %c0_i32_1 = arith.constant 0 : i32
    return %c0_i32, %c0_i32_0 : i32, i32
  }
  func.func @transform_9(%arg0: i32) -> (i32, i32) {
    %c0_i32 = arith.constant 0 : i32
    %c0_i32_0 = arith.constant 0 : i32
    %c0_i32_1 = arith.constant 0 : i32
    return %c0_i32, %c0_i32_0 : i32, i32
  }
  func.func @transform_10(%arg0: i32) -> (i32, i32) {
    %c0_i32 = arith.constant 0 : i32
    %c0_i32_0 = arith.constant 0 : i32
    %c0_i32_1 = arith.constant 0 : i32
    return %c0_i32, %c0_i32_0 : i32, i32
  }
  func.func @transform_11(%arg0: i32) -> (i32, i32) {
    %c0_i32 = arith.constant 0 : i32
    %c0_i32_0 = arith.constant 0 : i32
    %c0_i32_1 = arith.constant 0 : i32
    return %c0_i32, %c0_i32_0 : i32, i32
  }
  func.func @transform_12(%arg0: i32) -> (i32, i32) {
    %c0_i32 = arith.constant 0 : i32
    %c0_i32_0 = arith.constant 0 : i32
    %c0_i32_1 = arith.constant 0 : i32
    return %c0_i32, %c0_i32_0 : i32, i32
  }
  func.func @transform_13(%arg0: i32) -> (i32, i32) {
    %c0_i32 = arith.constant 0 : i32
    %c0_i32_0 = arith.constant 0 : i32
    %c0_i32_1 = arith.constant 0 : i32
    return %c0_i32, %c0_i32_0 : i32, i32
  }
  func.func @transform_14(%arg0: i32) -> (i32, i32) {
    %c0_i32 = arith.constant 0 : i32
    %c0_i32_0 = arith.constant 0 : i32
    %c0_i32_1 = arith.constant 0 : i32
    return %c0_i32, %c0_i32_0 : i32, i32
  }
  func.func @transform_15(%arg0: i32) -> (i32, i32, i32) {
    %c0_i32 = arith.constant 0 : i32
    %c0_i32_0 = arith.constant 0 : i32
    %c0_i32_1 = arith.constant 0 : i32
    return %arg0, %c0_i32, %c0_i32_0 : i32, i32, i32
  }
  func.func @transform_16(%arg0: i32) -> (i32, i32, i32) {
    %c0_i32 = arith.constant 0 : i32
    %c0_i32_0 = arith.constant 0 : i32
    %c0_i32_1 = arith.constant 0 : i32
    return %arg0, %c0_i32, %c0_i32_0 : i32, i32, i32
  }
  func.func @transform_17(%arg0: i32) -> (i32, i32, i32) {
    %c0_i32 = arith.constant 0 : i32
    %c0_i32_0 = arith.constant 0 : i32
    %c0_i32_1 = arith.constant 0 : i32
    return %arg0, %c0_i32, %c0_i32_0 : i32, i32, i32
  }
}

</mosaic_0001>

<llo_original>
// kernel: custom_oligo_forward.1
$region0: #{custom_oligo_forward.1}
  #allocation0 [shape = 'u32[]', space=smem, size = 0x4, offset = 0x4, fixed_abs, tag = 'smem constant byte address 0x4 - core index']
  #allocation1 [shape = 'u32[72,128]{1,0:T(1,128)}', space=vmem, size = 0x9000, scoped, tag = 'internal scratch']
  %s0 = inlined_call_operand.vmem [shape: f32[2,19,5], index: 0, kind: input, shape index: {}]
  %s1 = inlined_call_operand.vmem [shape: f32[2,50,5], index: 1, kind: input, shape index: {}]
  %s2 = inlined_call_operand.vmem [shape: f32[2,19,32], index: 2, kind: input, shape index: {}]
  %s3 = inlined_call_operand.vmem [shape: f32[2,50,32], index: 3, kind: input, shape index: {}]
  %s4 = inlined_call_operand.vmem [shape: f32[2,1,24], index: 4, kind: input, shape index: {}]
  %s5 = inlined_call_operand.vmem [shape: f32[5,48], index: 5, kind: input, shape index: {}]
  %s6 = inlined_call_operand.vmem [shape: f32[5,48], index: 6, kind: input, shape index: {}]
  %s7 = inlined_call_operand.vmem [shape: f32[19,1024], index: 7, kind: input, shape index: {}]
  %s8 = inlined_call_operand.hbm [shape: f32[57,1024], index: 8, kind: input, shape index: {}]
  %s9 = inlined_call_operand.vmem [shape: f32[32,64], index: 9, kind: input, shape index: {}]
  %s10 = inlined_call_operand.vmem [shape: f32[32,64], index: 10, kind: input, shape index: {}]
  %s11 = inlined_call_operand.hbm [shape: f32[24,64], index: 11, kind: input, shape index: {}]
  %s12 = inlined_call_operand.vmem [shape: f32[1,64], index: 12, kind: input, shape index: {}]
  %s13 = inlined_call_operand.vmem [shape: f32[64,128], index: 13, kind: input, shape index: {}]
  %s14 = inlined_call_operand.vmem [shape: f32[1,128], index: 14, kind: input, shape index: {}]
  %s15 = inlined_call_operand.hbm [shape: f32[2,1,128], index: 15, kind: output, shape index: {0}]
  %s16 = inlined_call_operand.vmem [shape: f32[2,19,19], index: 16, kind: output, shape index: {1}]
  %s17 = inlined_call_operand.vmem [shape: f32[2,50,50], index: 17, kind: output, shape index: {2}]
  %18 = xla_tuple %s15, %s16, %s17
  %s19 = sld [smem:[#allocation0]]
  $region117: #{custom_oligo_forward.1} parent=0
    _
  %s21 = ssub.s32 1, %s19
  %s22 = scalar_select 0, %s21, %s19
  $region1: #{custom_oligo_forward.1} parent=0
    #allocation2 [shape = 'u8[262144]{0}', space=vmem, size = 0x40000, scoped, tag = 'input window, operand 8, single buffered']
    #allocation3 [shape = 's32[2]{0}', space=sflag, size = 0x8, scoped, tag = 'scoped memory for custom_oligo_forward.1']
    #allocation4 [shape = 's32[2]{0}', space=sflag, size = 0x8, scoped, tag = 'scoped memory for custom_oligo_forward.1']
    #allocation5 [shape = 'u8[12288]{0}', space=vmem, size = 0x3000, scoped, tag = 'input window, operand 11, single buffered']
    #allocation6 [shape = 's32[1]{0}', space=sflag, size = 0x4, scoped, tag = 'scoped memory for custom_oligo_forward.1']
    #allocation7 [shape = 'u8[1024]{0}', space=vmem, size = 0x400, scoped, tag = 'output window, operand 0']
    %23 = vsyncpa [#allocation3], 0
    %24 = vsyncpa [#allocation6], 0
    %25 = vsyncpa [#allocation4], 0
    %s26 = scalar_lea.sflag [#allocation4], 1
    %27 = vsyncpa %s26, 0
    loop: start=0, step=1, limit=4
    $region2: #{custom_oligo_forward.1} parent=1 // loop_pre_header
      _
    $region3: #{custom_oligo_forward.1} parent=1 // loop_header
      %s29 = sphi 0, %s33
      %p30 = scmp.ge.s32.totalorder %s29, 4
      %s39 = sphi 0, %s41
      %s42 = sphi 0, %s39
      %s43 = sphi 0, %s42
      %s59 = sphi 0, %s43
      %s65 = sphi 0, %s67
      %s68 = sphi 0, %s65
      %s69 = sphi 0, %s68
      %s85 = sphi 0, %s69
      %s91 = sphi 0, %s93
      %s94 = sphi 0, %s91
      %s95 = sphi 0, %s94
      %s111 = sphi 0, %s95
      %s117 = sphi 0, %s119
      %s120 = sphi 0, %s117
      %s121 = sphi 0, %s120
      %s137 = sphi 0, %s121
      %s143 = sphi 0, %s145
      %s146 = sphi 0, %s143
      %s147 = sphi 0, %s146
      %s163 = sphi 0, %s147
      %s167 = sphi 0, %s167
      %s169 = sphi 0, %s167
      %s170 = sphi 0, %s169
      %s184 = sphi 0, %s170
      %s188 = sphi 0, %s188
      %s190 = sphi 0, %s188
      %s191 = sphi 0, %s190
      %s205 = sphi 0, %s191
      %s209 = sphi 0, %s209
      %s211 = sphi 0, %s209
      %s212 = sphi 0, %s211
      %s226 = sphi 0, %s212
      %s230 = sphi 0, %s230
      %s232 = sphi 0, %s230
      %s233 = sphi 0, %s232
      %s247 = sphi 0, %s233
      %s251 = sphi 0, %s251
      %s253 = sphi 0, %s251
      %s254 = sphi 0, %s253
      %s268 = sphi 0, %s254
      %s272 = sphi 0, %s272
      %s274 = sphi 0, %s272
      %s275 = sphi 0, %s274
      %s289 = sphi 0, %s275
      %s293 = sphi 0, %s293
      %s295 = sphi 0, %s293
      %s296 = sphi 0, %s295
      %s310 = sphi 0, %s296
      %s314 = sphi 0, %s314
      %s316 = sphi 0, %s314
      %s317 = sphi 0, %s316
      %s331 = sphi 0, %s317
      %s335 = sphi 0, %s335
      %s337 = sphi 0, %s335
      %s338 = sphi 0, %s337
      %s352 = sphi 0, %s338
      %s356 = sphi 0, %s356
      %s358 = sphi 0, %s356
      %s359 = sphi 0, %s358
      %s373 = sphi 0, %s359
      %s379 = sphi 0, %s381
      %s382 = sphi 0, %s379
      %s383 = sphi 0, %s382
      %s399 = sphi 0, %s383
      %s405 = sphi 0, %s407
      %s408 = sphi 0, %s405
      %s409 = sphi 0, %s408
      %s425 = sphi 0, %s409
      %s431 = sphi 0, %s433
      %s434 = sphi 0, %s431
      %s435 = sphi 0, %s434
      %s451 = sphi 0, %s435
    $region4: #{custom_oligo_forward.1} parent=1 // loop_header_branch
      %32 = sbr.rel (%p30) target = $region8
    $region5: #{custom_oligo_forward.1} parent=1 // loop_body
      %s34 = ssub.s32 %s29, 1
      %s35 = ssub.s32 %s29, 2
      %s36 = sadd.s32 %s29, 1
      %s37 = ssub.s32 %s29, %s36
      %p38 = scmp.eq.s32.totalorder %s37, 0
      %s40 = sadd.s32 %s39, 1
      %s41 = scalar_select %p38, %s39, %s40
      %p44 = pneg %p38
      %p45 = scmp.eq.s32.totalorder %s29, 1
      %p46 = por %p44, %p45
      %p47 = scmp.ne.s32.totalorder %s39, %s42
      %p48 = scmp.eq.s32.totalorder %s29, 0
      %p49 = por %p47, %p48
      %p50 = scmp.ne.s32.totalorder %s39, %s42
      %p51 = scmp.eq.s32.totalorder %s34, 1
      %p52 = por %p50, %p51
      %p53 = scmp.ne.s32.totalorder %s42, %s43
      %p54 = scmp.eq.s32.totalorder %s34, 0
      %p55 = por %p53, %p54
      %p56 = scmp.ne.s32.totalorder %s42, %s43
      %p57 = scmp.eq.s32.totalorder %s35, 1
      %p58 = por %p56, %p57
      %p60 = scmp.ne.s32.totalorder %s43, %s59
      %p61 = scmp.eq.s32.totalorder %s35, 0
      %p62 = por %p60, %p61
      %s63 = ssub.s32 %s29, %s36
      %p64 = scmp.eq.s32.totalorder %s63, 0
      %s66 = sadd.s32 %s65, 1
      %s67 = scalar_select %p64, %s65, %s66
      %p70 = pneg %p64
      %p71 = scmp.eq.s32.totalorder %s29, 1
      %p72 = por %p70, %p71
      %p73 = scmp.ne.s32.totalorder %s65, %s68
      %p74 = scmp.eq.s32.totalorder %s29, 0
      %p75 = por %p73, %p74
      %p76 = scmp.ne.s32.totalorder %s65, %s68
      %p77 = scmp.eq.s32.totalorder %s34, 1
      %p78 = por %p76, %p77
      %p79 = scmp.ne.s32.totalorder %s68, %s69
      %p80 = scmp.eq.s32.totalorder %s34, 0
      %p81 = por %p79, %p80
      %p82 = scmp.ne.s32.totalorder %s68, %s69
      %p83 = scmp.eq.s32.totalorder %s35, 1
      %p84 = por %p82, %p83
      %p86 = scmp.ne.s32.totalorder %s69, %s85
      %p87 = scmp.eq.s32.totalorder %s35, 0
      %p88 = por %p86, %p87
      %s89 = ssub.s32 %s29, %s36
      %p90 = scmp.eq.s32.totalorder %s89, 0
      %s92 = sadd.s32 %s91, 1
      %s93 = scalar_select %p90, %s91, %s92
      %p96 = pneg %p90
      %p97 = scmp.eq.s32.totalorder %s29, 1
      %p98 = por %p96, %p97
      %p99 = scmp.ne.s32.totalorder %s91, %s94
      %p100 = scmp.eq.s32.totalorder %s29, 0
      %p101 = por %p99, %p100
      %p102 = scmp.ne.s32.totalorder %s91, %s94
      %p103 = scmp.eq.s32.totalorder %s34, 1
      %p104 = por %p102, %p103
      %p105 = scmp.ne.s32.totalorder %s94, %s95
      %p106 = scmp.eq.s32.totalorder %s34, 0
      %p107 = por %p105, %p106
      %p108 = scmp.ne.s32.totalorder %s94, %s95
      %p109 = scmp.eq.s32.totalorder %s35, 1
      %p110 = por %p108, %p109
      %p112 = scmp.ne.s32.totalorder %s95, %s111
      %p113 = scmp.eq.s32.totalorder %s35, 0
      %p114 = por %p112, %p113
      %s115 = ssub.s32 %s29, %s36
      %p116 = scmp.eq.s32.totalorder %s115, 0
      %s118 = sadd.s32 %s117, 1
      %s119 = scalar_select %p116, %s117, %s118
      %p122 = pneg %p116
      %p123 = scmp.eq.s32.totalorder %s29, 1
      %p124 = por %p122, %p123
      %p125 = scmp.ne.s32.totalorder %s117, %s120
      %p126 = scmp.eq.s32.totalorder %s29, 0
      %p127 = por %p125, %p126
      %p128 = scmp.ne.s32.totalorder %s117, %s120
      %p129 = scmp.eq.s32.totalorder %s34, 1
      %p130 = por %p128, %p129
      %p131 = scmp.ne.s32.totalorder %s120, %s121
      %p132 = scmp.eq.s32.totalorder %s34, 0
      %p133 = por %p131, %p132
      %p134 = scmp.ne.s32.totalorder %s120, %s121
      %p135 = scmp.eq.s32.totalorder %s35, 1
      %p136 = por %p134, %p135
      %p138 = scmp.ne.s32.totalorder %s121, %s137
      %p139 = scmp.eq.s32.totalorder %s35, 0
      %p140 = por %p138, %p139
      %s141 = ssub.s32 %s29, %s36
      %p142 = scmp.eq.s32.totalorder %s141, 0
      %s144 = sadd.s32 %s143, 1
      %s145 = scalar_select %p142, %s143, %s144
      %p148 = pneg %p142
      %p149 = scmp.eq.s32.totalorder %s29, 1
      %p150 = por %p148, %p149
      %p151 = scmp.ne.s32.totalorder %s143, %s146
      %p152 = scmp.eq.s32.totalorder %s29, 0
      %p153 = por %p151, %p152
      %p154 = scmp.ne.s32.totalorder %s143, %s146
      %p155 = scmp.eq.s32.totalorder %s34, 1
      %p156 = por %p154, %p155
      %p157 = scmp.ne.s32.totalorder %s146, %s147
      %p158 = scmp.eq.s32.totalorder %s34, 0
      %p159 = por %p157, %p158
      %p160 = scmp.ne.s32.totalorder %s146, %s147
      %p161 = scmp.eq.s32.totalorder %s35, 1
      %p162 = por %p160, %p161
      %p164 = scmp.ne.s32.totalorder %s147, %s163
      %p165 = scmp.eq.s32.totalorder %s35, 0
      %p166 = por %p164, %p165
      %s168 = sadd.s32 %s167, 1
      %p171 = scmp.eq.s32.totalorder %s29, 1
      %p172 = scmp.ne.s32.totalorder %s167, %s169
      %p173 = scmp.eq.s32.totalorder %s29, 0
      %p174 = por %p172, %p173
      %p175 = scmp.ne.s32.totalorder %s167, %s169
      %p176 = scmp.eq.s32.totalorder %s34, 1
      %p177 = por %p175, %p176
      %p178 = scmp.ne.s32.totalorder %s169, %s170
      %p179 = scmp.eq.s32.totalorder %s34, 0
      %p180 = por %p178, %p179
      %p181 = scmp.ne.s32.totalorder %s169, %s170
      %p182 = scmp.eq.s32.totalorder %s35, 1
      %p183 = por %p181, %p182
      %p185 = scmp.ne.s32.totalorder %s170, %s184
      %p186 = scmp.eq.s32.totalorder %s35, 0
      %p187 = por %p185, %p186
      %s189 = sadd.s32 %s188, 1
      %p192 = scmp.eq.s32.totalorder %s29, 1
      %p193 = scmp.ne.s32.totalorder %s188, %s190
      %p194 = scmp.eq.s32.totalorder %s29, 0
      %p195 = por %p193, %p194
      %p196 = scmp.ne.s32.totalorder %s188, %s190
      %p197 = scmp.eq.s32.totalorder %s34, 1
      %p198 = por %p196, %p197
      %p199 = scmp.ne.s32.totalorder %s190, %s191
      %p200 = scmp.eq.s32.totalorder %s34, 0
      %p201 = por %p199, %p200
      %p202 = scmp.ne.s32.totalorder %s190, %s191
      %p203 = scmp.eq.s32.totalorder %s35, 1
      %p204 = por %p202, %p203
      %p206 = scmp.ne.s32.totalorder %s191, %s205
      %p207 = scmp.eq.s32.totalorder %s35, 0
      %p208 = por %p206, %p207
      %s210 = sadd.s32 %s209, 1
      %p213 = scmp.eq.s32.totalorder %s29, 1
      %p214 = scmp.ne.s32.totalorder %s209, %s211
      %p215 = scmp.eq.s32.totalorder %s29, 0
      %p216 = por %p214, %p215
      %p217 = scmp.ne.s32.totalorder %s209, %s211
      %p218 = scmp.eq.s32.totalorder %s34, 1
      %p219 = por %p217, %p218
      %p220 = scmp.ne.s32.totalorder %s211, %s212
      %p221 = scmp.eq.s32.totalorder %s34, 0
      %p222 = por %p220, %p221
      %p223 = scmp.ne.s32.totalorder %s211, %s212
      %p224 = scmp.eq.s32.totalorder %s35, 1
      %p225 = por %p223, %p224
      %p227 = scmp.ne.s32.totalorder %s212, %s226
      %p228 = scmp.eq.s32.totalorder %s35, 0
      %p229 = por %p227, %p228
      %s231 = sadd.s32 %s230, 1
      %p234 = scmp.eq.s32.totalorder %s29, 1
      %p235 = scmp.ne.s32.totalorder %s230, %s232
      %p236 = scmp.eq.s32.totalorder %s29, 0
      %p237 = por %p235, %p236
      %p238 = scmp.ne.s32.totalorder %s230, %s232
      %p239 = scmp.eq.s32.totalorder %s34, 1
      %p240 = por %p238, %p239
      %p241 = scmp.ne.s32.totalorder %s232, %s233
      %p242 = scmp.eq.s32.totalorder %s34, 0
      %p243 = por %p241, %p242
      %p244 = scmp.ne.s32.totalorder %s232, %s233
      %p245 = scmp.eq.s32.totalorder %s35, 1
      %p246 = por %p244, %p245
      %p248 = scmp.ne.s32.totalorder %s233, %s247
      %p249 = scmp.eq.s32.totalorder %s35, 0
      %p250 = por %p248, %p249
      %s252 = sadd.s32 %s251, 1
      %p255 = scmp.eq.s32.totalorder %s29, 1
      %p256 = scmp.ne.s32.totalorder %s251, %s253
      %p257 = scmp.eq.s32.totalorder %s29, 0
      %p258 = por %p256, %p257
      %p259 = scmp.ne.s32.totalorder %s251, %s253
      %p260 = scmp.eq.s32.totalorder %s34, 1
      %p261 = por %p259, %p260
      %p262 = scmp.ne.s32.totalorder %s253, %s254
      %p263 = scmp.eq.s32.totalorder %s34, 0
      %p264 = por %p262, %p263
      %p265 = scmp.ne.s32.totalorder %s253, %s254
      %p266 = scmp.eq.s32.totalorder %s35, 1
      %p267 = por %p265, %p266
      %p269 = scmp.ne.s32.totalorder %s254, %s268
      %p270 = scmp.eq.s32.totalorder %s35, 0
      %p271 = por %p269, %p270
      %s273 = sadd.s32 %s272, 1
      %p276 = scmp.eq.s32.totalorder %s29, 1
      %p277 = scmp.ne.s32.totalorder %s272, %s274
      %p278 = scmp.eq.s32.totalorder %s29, 0
      %p279 = por %p277, %p278
      %p280 = scmp.ne.s32.totalorder %s272, %s274
      %p281 = scmp.eq.s32.totalorder %s34, 1
      %p282 = por %p280, %p281
      %p283 = scmp.ne.s32.totalorder %s274, %s275
      %p284 = scmp.eq.s32.totalorder %s34, 0
      %p285 = por %p283, %p284
      %p286 = scmp.ne.s32.totalorder %s274, %s275
      %p287 = scmp.eq.s32.totalorder %s35, 1
      %p288 = por %p286, %p287
      %p290 = scmp.ne.s32.totalorder %s275, %s289
      %p291 = scmp.eq.s32.totalorder %s35, 0
      %p292 = por %p290, %p291
      %s294 = sadd.s32 %s293, 1
      %p297 = scmp.eq.s32.totalorder %s29, 1
      %p298 = scmp.ne.s32.totalorder %s293, %s295
      %p299 = scmp.eq.s32.totalorder %s29, 0
      %p300 = por %p298, %p299
      %p301 = scmp.ne.s32.totalorder %s293, %s295
      %p302 = scmp.eq.s32.totalorder %s34, 1
      %p303 = por %p301, %p302
      %p304 = scmp.ne.s32.totalorder %s295, %s296
      %p305 = scmp.eq.s32.totalorder %s34, 0
      %p306 = por %p304, %p305
      %p307 = scmp.ne.s32.totalorder %s295, %s296
      %p308 = scmp.eq.s32.totalorder %s35, 1
      %p309 = por %p307, %p308
      %p311 = scmp.ne.s32.totalorder %s296, %s310
      %p312 = scmp.eq.s32.totalorder %s35, 0
      %p313 = por %p311, %p312
      %s315 = sadd.s32 %s314, 1
      %p318 = scmp.eq.s32.totalorder %s29, 1
      %p319 = scmp.ne.s32.totalorder %s314, %s316
      %p320 = scmp.eq.s32.totalorder %s29, 0
      %p321 = por %p319, %p320
      %p322 = scmp.ne.s32.totalorder %s314, %s316
      %p323 = scmp.eq.s32.totalorder %s34, 1
      %p324 = por %p322, %p323
      %p325 = scmp.ne.s32.totalorder %s316, %s317
      %p326 = scmp.eq.s32.totalorder %s34, 0
      %p327 = por %p325, %p326
      %p328 = scmp.ne.s32.totalorder %s316, %s317
      %p329 = scmp.eq.s32.totalorder %s35, 1
      %p330 = por %p328, %p329
      %p332 = scmp.ne.s32.totalorder %s317, %s331
      %p333 = scmp.eq.s32.totalorder %s35, 0
      %p334 = por %p332, %p333
      %s336 = sadd.s32 %s335, 1
      %p339 = scmp.eq.s32.totalorder %s29, 1
      %p340 = scmp.ne.s32.totalorder %s335, %s337
      %p341 = scmp.eq.s32.totalorder %s29, 0
      %p342 = por %p340, %p341
      %p343 = scmp.ne.s32.totalorder %s335, %s337
      %p344 = scmp.eq.s32.totalorder %s34, 1
      %p345 = por %p343, %p344
      %p346 = scmp.ne.s32.totalorder %s337, %s338
      %p347 = scmp.eq.s32.totalorder %s34, 0
      %p348 = por %p346, %p347
      %p349 = scmp.ne.s32.totalorder %s337, %s338
      %p350 = scmp.eq.s32.totalorder %s35, 1
      %p351 = por %p349, %p350
      %p353 = scmp.ne.s32.totalorder %s338, %s352
      %p354 = scmp.eq.s32.totalorder %s35, 0
      %p355 = por %p353, %p354
      %s357 = sadd.s32 %s356, 1
      %p360 = scmp.eq.s32.totalorder %s29, 1
      %p361 = scmp.ne.s32.totalorder %s356, %s358
      %p362 = scmp.eq.s32.totalorder %s29, 0
      %p363 = por %p361, %p362
      %p364 = scmp.ne.s32.totalorder %s356, %s358
      %p365 = scmp.eq.s32.totalorder %s34, 1
      %p366 = por %p364, %p365
      %p367 = scmp.ne.s32.totalorder %s358, %s359
      %p368 = scmp.eq.s32.totalorder %s34, 0
      %p369 = por %p367, %p368
      %p370 = scmp.ne.s32.totalorder %s358, %s359
      %p371 = scmp.eq.s32.totalorder %s35, 1
      %p372 = por %p370, %p371
      %p374 = scmp.ne.s32.totalorder %s359, %s373
      %p375 = scmp.eq.s32.totalorder %s35, 0
      %p376 = por %p374, %p375
      %s377 = ssub.s32 %s29, %s36
      %p378 = scmp.eq.s32.totalorder %s377, 0
      %s380 = sadd.s32 %s379, 1
      %s381 = scalar_select %p378, %s379, %s380
      %p384 = pneg %p378
      %p385 = scmp.eq.s32.totalorder %s29, 1
      %p386 = por %p384, %p385
      %p387 = scmp.ne.s32.totalorder %s379, %s382
      %p388 = scmp.eq.s32.totalorder %s29, 0
      %p389 = por %p387, %p388
      %p390 = scmp.ne.s32.totalorder %s379, %s382
      %p391 = scmp.eq.s32.totalorder %s34, 1
      %p392 = por %p390, %p391
      %p393 = scmp.ne.s32.totalorder %s382, %s383
      %p394 = scmp.eq.s32.totalorder %s34, 0
      %p395 = por %p393, %p394
      %p396 = scmp.ne.s32.totalorder %s382, %s383
      %p397 = scmp.eq.s32.totalorder %s35, 1
      %p398 = por %p396, %p397
      %p400 = scmp.ne.s32.totalorder %s383, %s399
      %p401 = scmp.eq.s32.totalorder %s35, 0
      %p402 = por %p400, %p401
      %s403 = ssub.s32 %s29, %s36
      %p404 = scmp.eq.s32.totalorder %s403, 0
      %s406 = sadd.s32 %s405, 1
      %s407 = scalar_select %p404, %s405, %s406
      %p410 = pneg %p404
      %p411 = scmp.eq.s32.totalorder %s29, 1
      %p412 = por %p410, %p411
      %p413 = scmp.ne.s32.totalorder %s405, %s408
      %p414 = scmp.eq.s32.totalorder %s29, 0
      %p415 = por %p413, %p414
      %p416 = scmp.ne.s32.totalorder %s405, %s408
      %p417 = scmp.eq.s32.totalorder %s34, 1
      %p418 = por %p416, %p417
      %p419 = scmp.ne.s32.totalorder %s408, %s409
      %p420 = scmp.eq.s32.totalorder %s34, 0
      %p421 = por %p419, %p420
      %p422 = scmp.ne.s32.totalorder %s408, %s409
      %p423 = scmp.eq.s32.totalorder %s35, 1
      %p424 = por %p422, %p423
      %p426 = scmp.ne.s32.totalorder %s409, %s425
      %p427 = scmp.eq.s32.totalorder %s35, 0
      %p428 = por %p426, %p427
      %s429 = ssub.s32 %s29, %s36
      %p430 = scmp.eq.s32.totalorder %s429, 0
      %s432 = sadd.s32 %s431, 1
      %s433 = scalar_select %p430, %s431, %s432
      %p436 = pneg %p430
      %p437 = scmp.eq.s32.totalorder %s29, 1
      %p438 = por %p436, %p437
      %p439 = scmp.ne.s32.totalorder %s431, %s434
      %p440 = scmp.eq.s32.totalorder %s29, 0
      %p441 = por %p439, %p440
      %p442 = scmp.ne.s32.totalorder %s431, %s434
      %p443 = scmp.eq.s32.totalorder %s34, 1
      %p444 = por %p442, %p443
      %p445 = scmp.ne.s32.totalorder %s434, %s435
      %p446 = scmp.eq.s32.totalorder %s34, 0
      %p447 = por %p445, %p446
      %p448 = scmp.ne.s32.totalorder %s434, %s435
      %p449 = scmp.eq.s32.totalorder %s35, 1
      %p450 = por %p448, %p449
      %p452 = scmp.ne.s32.totalorder %s435, %s451
      %p453 = scmp.eq.s32.totalorder %s35, 0
      %p454 = por %p452, %p453
      %p455 = scmp.le.s32.totalorder 1, %s29
      %p456 = scmp.lt.s32.totalorder %s29, 3
      %p457 = pnand %p455, %p456
      %p458 = pneg %p457
      // Predicated region
      $region9: #{custom_oligo_forward.1} parent=5 // pred_check
        _
      $region10: #{custom_oligo_forward.1} parent=5 // pred_check_branch
        %460 = sbr.rel (%p457) target = $region12
      $region11: #{custom_oligo_forward.1} parent=5 // pred_region
        %s461 = ssub.s32 %s29, 1
        // Predicated region
        $region13: #{custom_oligo_forward.1} parent=11 // pred_check
          %p462 = pneg %p180
        $region14: #{custom_oligo_forward.1} parent=11 // pred_check_branch
          %464 = sbr.rel (%p462) target = $region16
        $region15: #{custom_oligo_forward.1} parent=11 // pred_region
          _
        $region16: #{custom_oligo_forward.1} parent=11 // pred_fallthru
          _
        // Predicated region
        $region17: #{custom_oligo_forward.1} parent=11 // pred_check
          %p465 = pneg %p201
        $region18: #{custom_oligo_forward.1} parent=11 // pred_check_branch
          %467 = sbr.rel (%p465) target = $region20
        $region19: #{custom_oligo_forward.1} parent=11 // pred_region
          _
        $region20: #{custom_oligo_forward.1} parent=11 // pred_fallthru
          _
        // Predicated region
        $region21: #{custom_oligo_forward.1} parent=11 // pred_check
          %p468 = pneg %p222
        $region22: #{custom_oligo_forward.1} parent=11 // pred_check_branch
          %470 = sbr.rel (%p468) target = $region24
        $region23: #{custom_oligo_forward.1} parent=11 // pred_region
          _
        $region24: #{custom_oligo_forward.1} parent=11 // pred_fallthru
          _
        // Predicated region
        $region25: #{custom_oligo_forward.1} parent=11 // pred_check
          %p471 = pneg %p243
        $region26: #{custom_oligo_forward.1} parent=11 // pred_check_branch
          %473 = sbr.rel (%p471) target = $region28
        $region27: #{custom_oligo_forward.1} parent=11 // pred_region
          %475 = vsyncadd [#allocation3], 0
          %s476 = sshll.u32 %s8, 4
          %s477 = int_to_ptr.hbm [resolvable:$true] %s476
          %s478 = sshll.u32 [#allocation2], 4
          %s479 = int_to_ptr.vmem [resolvable:$true] %s478
          %484 = dma.hbm_to_vmem [thread:$0]  %s477, 8192, %s479, [#allocation3], 1024, 1024, 64
        $region28: #{custom_oligo_forward.1} parent=11 // pred_fallthru
          _
        // Predicated region
        $region29: #{custom_oligo_forward.1} parent=11 // pred_check
          %p485 = pneg %p264
        $region30: #{custom_oligo_forward.1} parent=11 // pred_check_branch
          %487 = sbr.rel (%p485) target = $region32
        $region31: #{custom_oligo_forward.1} parent=11 // pred_region
          _
        $region32: #{custom_oligo_forward.1} parent=11 // pred_fallthru
          _
        // Predicated region
        $region33: #{custom_oligo_forward.1} parent=11 // pred_check
          %p488 = pneg %p285
        $region34: #{custom_oligo_forward.1} parent=11 // pred_check_branch
          %490 = sbr.rel (%p488) target = $region36
        $region35: #{custom_oligo_forward.1} parent=11 // pred_region
          _
        $region36: #{custom_oligo_forward.1} parent=11 // pred_fallthru
          _
        // Predicated region
        $region37: #{custom_oligo_forward.1} parent=11 // pred_check
          %p491 = pneg %p306
        $region38: #{custom_oligo_forward.1} parent=11 // pred_check_branch
          %493 = sbr.rel (%p491) target = $region40
        $region39: #{custom_oligo_forward.1} parent=11 // pred_region
          %495 = vsyncadd [#allocation6], 0
          %s496 = sshll.u32 %s11, 4
          %s497 = int_to_ptr.hbm [resolvable:$true] %s496
          %s498 = sshll.u32 [#allocation5], 4
          %s499 = int_to_ptr.vmem [resolvable:$true] %s498
          %504 = dma.hbm_to_vmem [thread:$0]  %s497, 384, %s499, [#allocation6], 128, 128, 8
        $region40: #{custom_oligo_forward.1} parent=11 // pred_fallthru
          _
        // Predicated region
        $region41: #{custom_oligo_forward.1} parent=11 // pred_check
          %p505 = pneg %p327
        $region42: #{custom_oligo_forward.1} parent=11 // pred_check_branch
          %507 = sbr.rel (%p505) target = $region44
        $region43: #{custom_oligo_forward.1} parent=11 // pred_region
          _
        $region44: #{custom_oligo_forward.1} parent=11 // pred_fallthru
          _
        // Predicated region
        $region45: #{custom_oligo_forward.1} parent=11 // pred_check
          %p508 = pneg %p348
        $region46: #{custom_oligo_forward.1} parent=11 // pred_check_branch
          %510 = sbr.rel (%p508) target = $region48
        $region47: #{custom_oligo_forward.1} parent=11 // pred_region
          _
        $region48: #{custom_oligo_forward.1} parent=11 // pred_fallthru
          _
        // Predicated region
        $region49: #{custom_oligo_forward.1} parent=11 // pred_check
          %p511 = pneg %p369
        $region50: #{custom_oligo_forward.1} parent=11 // pred_check_branch
          %513 = sbr.rel (%p511) target = $region52
        $region51: #{custom_oligo_forward.1} parent=11 // pred_region
          _
        $region52: #{custom_oligo_forward.1} parent=11 // pred_fallthru
          _
      $region12: #{custom_oligo_forward.1} parent=5 // pred_fallthru
        _
      %p514 = scmp.lt.s32.totalorder %s29, 2
      // Predicated region
      $region53: #{custom_oligo_forward.1} parent=5 // pred_check
        %p515 = pneg %p514
      $region54: #{custom_oligo_forward.1} parent=5 // pred_check_branch
        %517 = sbr.rel (%p515) target = $region56
      $region55: #{custom_oligo_forward.1} parent=5 // pred_region
        // Predicated region
        $region57: #{custom_oligo_forward.1} parent=55 // pred_check
          %p518 = pneg %p49
        $region58: #{custom_oligo_forward.1} parent=55 // pred_check_branch
          %520 = sbr.rel (%p518) target = $region60
        $region59: #{custom_oligo_forward.1} parent=55 // pred_region
          %p521 = scmp.lt.s32.totalorder %s29, 1
          %s522 = scalar_select %p521, %s29, 1
          %s523 = smul.addr %s522, 3
          %s524 = smul.addr %s523, 8
          %s525 = scalar_lea.vmem %s0, %s524
        $region60: #{custom_oligo_forward.1} parent=55 // pred_fallthru
          _
        // Predicated region
        $region61: #{custom_oligo_forward.1} parent=55 // pred_check
          %p526 = pneg %p75
        $region62: #{custom_oligo_forward.1} parent=55 // pred_check_branch
          %528 = sbr.rel (%p526) target = $region64
        $region63: #{custom_oligo_forward.1} parent=55 // pred_region
          %p529 = scmp.lt.s32.totalorder %s29, 1
          %s530 = scalar_select %p529, %s29, 1
          %s531 = smul.addr %s530, 7
          %s532 = smul.addr %s531, 8
          %s533 = scalar_lea.vmem %s1, %s532
        $region64: #{custom_oligo_forward.1} parent=55 // pred_fallthru
          _
        // Predicated region
        $region65: #{custom_oligo_forward.1} parent=55 // pred_check
          %p534 = pneg %p101
        $region66: #{custom_oligo_forward.1} parent=55 // pred_check_branch
          %536 = sbr.rel (%p534) target = $region68
        $region67: #{custom_oligo_forward.1} parent=55 // pred_region
          %p537 = scmp.lt.s32.totalorder %s29, 1
          %s538 = scalar_select %p537, %s29, 1
          %s539 = smul.addr %s538, 3
          %s540 = smul.addr %s539, 8
          %s541 = scalar_lea.vmem %s2, %s540
        $region68: #{custom_oligo_forward.1} parent=55 // pred_fallthru
          _
        // Predicated region
        $region69: #{custom_oligo_forward.1} parent=55 // pred_check
          %p542 = pneg %p127
        $region70: #{custom_oligo_forward.1} parent=55 // pred_check_branch
          %544 = sbr.rel (%p542) target = $region72
        $region71: #{custom_oligo_forward.1} parent=55 // pred_region
          %p545 = scmp.lt.s32.totalorder %s29, 1
          %s546 = scalar_select %p545, %s29, 1
          %s547 = smul.addr %s546, 7
          %s548 = smul.addr %s547, 8
          %s549 = scalar_lea.vmem %s3, %s548
        $region72: #{custom_oligo_forward.1} parent=55 // pred_fallthru
          _
        // Predicated region
        $region73: #{custom_oligo_forward.1} parent=55 // pred_check
          %p550 = pneg %p153
        $region74: #{custom_oligo_forward.1} parent=55 // pred_check_branch
          %552 = sbr.rel (%p550) target = $region76
        $region75: #{custom_oligo_forward.1} parent=55 // pred_region
          %p553 = scmp.lt.s32.totalorder %s29, 1
          %s554 = scalar_select %p553, %s29, 1
          %s555 = scalar_lea.vmem %s4, %s554
        $region76: #{custom_oligo_forward.1} parent=55 // pred_fallthru
          _
      $region56: #{custom_oligo_forward.1} parent=5 // pred_fallthru
        _
      %p556 = scmp.le.s32.totalorder 1, %s29
      %p557 = scmp.lt.s32.totalorder %s29, 3
      %p558 = pnand %p556, %p557
      %p559 = pneg %p558
      // Predicated region
      $region77: #{custom_oligo_forward.1} parent=5 // pred_check
        _
      $region78: #{custom_oligo_forward.1} parent=5 // pred_check_branch
        %561 = sbr.rel (%p558) target = $region80
      $region79: #{custom_oligo_forward.1} parent=5 // pred_region
        %s562 = ssub.s32 %s29, 1
        // Predicated region
        $region81: #{custom_oligo_forward.1} parent=79 // pred_check
          %p563 = pneg %p243
        $region82: #{custom_oligo_forward.1} parent=79 // pred_check_branch
          %565 = sbr.rel (%p563) target = $region84
        $region83: #{custom_oligo_forward.1} parent=79 // pred_region
          %567 = dma.done [#allocation3], 8192
        $region84: #{custom_oligo_forward.1} parent=79 // pred_fallthru
          _
        // Predicated region
        $region85: #{custom_oligo_forward.1} parent=79 // pred_check
          %p568 = pneg %p306
        $region86: #{custom_oligo_forward.1} parent=79 // pred_check_branch
          %570 = sbr.rel (%p568) target = $region88
        $region87: #{custom_oligo_forward.1} parent=79 // pred_region
          %572 = dma.done [#allocation6], 384
        $region88: #{custom_oligo_forward.1} parent=79 // pred_fallthru
          _
        %p573 = scmp.lt.s32.totalorder %s34, 1
        %s574 = scalar_select %p573, %s34, 1
        %s575 = smul.addr %s574, 3
        %s576 = smul.addr %s575, 8
        %s577 = scalar_lea.vmem %s0, %s576
        %p578 = pneg %p55
        %p579 = pneg %p52
        %p580 = scmp.lt.s32.totalorder %s34, 1
        %s581 = scalar_select %p580, %s34, 1
        %s582 = smul.addr %s581, 7
        %s583 = smul.addr %s582, 8
        %s584 = scalar_lea.vmem %s1, %s583
        %p585 = pneg %p81
        %p586 = pneg %p78
        %p587 = scmp.lt.s32.totalorder %s34, 1
        %s588 = scalar_select %p587, %s34, 1
        %s589 = smul.addr %s588, 3
        %s590 = smul.addr %s589, 8
        %s591 = scalar_lea.vmem %s2, %s590
        %p592 = pneg %p107
        %p593 = pneg %p104
        %p594 = scmp.lt.s32.totalorder %s34, 1
        %s595 = scalar_select %p594, %s34, 1
        %s596 = smul.addr %s595, 7
        %s597 = smul.addr %s596, 8
        %s598 = scalar_lea.vmem %s3, %s597
        %p599 = pneg %p133
        %p600 = pneg %p130
        %p601 = scmp.lt.s32.totalorder %s34, 1
        %s602 = scalar_select %p601, %s34, 1
        %s603 = scalar_lea.vmem %s4, %s602
        %p604 = pneg %p159
        %p605 = pneg %p156
        %p606 = pneg %p180
        %p607 = pneg %p177
        %p608 = pneg %p201
        %p609 = pneg %p198
        %p610 = pneg %p222
        %p611 = pneg %p219
        %p612 = pneg %p243
        %p613 = pneg %p240
        %p614 = pneg %p264
        %p615 = pneg %p261
        %p616 = pneg %p285
        %p617 = pneg %p282
        %p618 = pneg %p306
        %p619 = pneg %p303
        %p620 = pneg %p327
        %p621 = pneg %p324
        %p622 = pneg %p348
        %p623 = pneg %p345
        %p624 = pneg %p369
        %p625 = pneg %p366
        %p626 = pneg %p395
        %p627 = pneg %p392
        %s628 = sand.u32 %s382, 1
        %s629 = scalar_lea.sflag [#allocation4], %s628
        %s630 = sand.u32 %s382, 1
        %s631 = scalar_lea.vmem [#allocation7], %s630
        %p632 = pneg %p421
        %p633 = pneg %p418
        %p634 = scmp.lt.s32.totalorder %s34, 1
        %s635 = scalar_select %p634, %s34, 1
        %s636 = smul.addr %s635, 3
        %s637 = smul.addr %s636, 8
        %s638 = scalar_lea.vmem %s16, %s637
        %p639 = pneg %p447
        %p640 = pneg %p444
        %p641 = scmp.lt.s32.totalorder %s34, 1
        %s642 = scalar_select %p641, %s34, 1
        %s643 = smul.addr %s642, 7
        %s644 = smul.addr %s643, 8
        %s645 = scalar_lea.vmem %s17, %s644
        %p646 = scmp.lt.s32.totalorder %s34, 1
        %s647 = scalar_select %p646, %s34, 1
        %s648 = smul.addr %s647, 3
        %s649 = smul.addr %s648, 8
        %s650 = scalar_lea.vmem %s0, %s649
        %p651 = scmp.lt.s32.totalorder %s34, 1
        %s652 = scalar_select %p651, %s34, 1
        %s653 = smul.addr %s652, 7
        %s654 = smul.addr %s653, 8
        %s655 = scalar_lea.vmem %s1, %s654
        %p656 = scmp.lt.s32.totalorder %s34, 1
        %s657 = scalar_select %p656, %s34, 1
        %s658 = smul.addr %s657, 3
        %s659 = smul.addr %s658, 8
        %s660 = scalar_lea.vmem %s2, %s659
        %p661 = scmp.lt.s32.totalorder %s34, 1
        %s662 = scalar_select %p661, %s34, 1
        %s663 = smul.addr %s662, 7
        %s664 = smul.addr %s663, 8
        %s665 = scalar_lea.vmem %s3, %s664
        %p666 = scmp.lt.s32.totalorder %s34, 1
        %s667 = scalar_select %p666, %s34, 1
        %s668 = scalar_lea.vmem %s4, %s667
        %p669 = scmp.lt.s32.totalorder %s34, 1
        %s670 = scalar_select %p669, %s34, 1
        %s671 = smul.addr %s670, 3
        %s672 = smul.addr %s671, 8
        %s673 = scalar_lea.vmem %s16, %s672
        %p674 = scmp.lt.s32.totalorder %s34, 1
        %s675 = scalar_select %p674, %s34, 1
        %s676 = smul.addr %s675, 7
        %s677 = smul.addr %s676, 8
        %s678 = scalar_lea.vmem %s17, %s677
        %v679 = vld [vmem:[%s650] sm:$0xff]
        %v680 = vld [vmem:[%s650 + $0x8] sm:$0xff]
        %v681 = vld [vmem:[%s650 + $0x10] sm:$0x7]
        %v682 = vld [vmem:[%s5] sm:$0x1f]
        %vm683 = vcmask 39936
        %v685 = vsel %vm683, %v679, 0
        %v688 = vsel %vm683, %v680, 0
        %v691 = vsel %vm683, %v681, 0
        %vm693 = vcmask 1044480
        %v695 = vsel %vm693, %v682, 0
        %697 = vmatpush.msra.mxu0 0.0
        %698 = vmatpush.msra.mxu0 0.0
        %699 = vmatpush.msra.mxu0 0.0
        %700 = vmatpush.msra.mxu0 0.0
        %701 = vmatpush.msra.mxu0 0.0
        %702 = vmatpush.msra.mxu0 0.0
        %703 = vmatpush.msra.mxu0 0.0
        %704 = vmatpush.msra.mxu0 0.0
        %705 = vmatpush.msra.mxu0 0.0
        %706 = vmatpush.msra.mxu0 0.0
        %707 = vmatpush.msra.mxu0 0.0
        %708 = vmatpush.msra.mxu0 0.0
        %709 = vmatpush.msra.mxu0 0.0
        %710 = vmatpush.msra.mxu0 0.0
        %711 = vmatpush.msra.mxu0 0.0
        %712 = vmatpush.msra.mxu0 %v695
        %713 = vmatmul.f32.gmra.mxu0 %v685
        %v714 = vpop.f32.mrf.mxu0
        %v715 = vadd.f32 0.0, %v714
        %716 = vmatmul.f32.gmra.mxu0 %v688
        %v717 = vpop.f32.mrf.mxu0
        %v718 = vadd.f32 0.0, %v717
        %719 = vmatmul.f32.gmra.mxu0 %v691
        %v720 = vpop.f32.mrf.mxu0
        %v721 = vadd.f32 0.0, %v720
        %722 = vdwg.mxu0
        %726 = vrot.lane.b32.xlu0 %v715, 112
        %v727 = vpop.permute.xlu0 %726
        %728 = vrot.lane.b32.xlu0 %v718, 112
        %v729 = vpop.permute.xlu0 %728
        %730 = vrot.lane.b32.xlu0 %v721, 112
        %v731 = vpop.permute.xlu0 %730
        %vm732 = vcmask 130048
        %v733 = vsel %vm732, %v715, 0
        %v735 = vsel %vm732, %v718, 0
        %v737 = vsel %vm732, %v721, 0
        %v739 = vsel %vm732, %v727, 0
        %v741 = vsel %vm732, %v729, 0
        %v743 = vsel %vm732, %v731, 0
        %745 = vmatpush.xpose.msra.mxu0 0.0
        %746 = vmatpush.xpose.msra.mxu0 0.0
        %747 = vmatpush.xpose.msra.mxu0 0.0
        %748 = vmatpush.xpose.msra.mxu0 0.0
        %749 = vmatpush.xpose.msra.mxu0 0.0
        %750 = vmatpush.xpose.msra.mxu0 0.0
        %751 = vmatpush.xpose.msra.mxu0 0.0
        %752 = vmatpush.xpose.msra.mxu0 0.0
        %753 = vmatpush.xpose.msra.mxu0 0.0
        %754 = vmatpush.xpose.msra.mxu0 0.0
        %755 = vmatpush.xpose.msra.mxu0 0.0
        %756 = vmatpush.xpose.msra.mxu0 0.0
        %757 = vmatpush.xpose.msra.mxu0 0.0
        %758 = vmatpush.xpose.msra.mxu0 %v743
        %759 = vmatpush.xpose.msra.mxu0 %v741
        %760 = vmatpush.xpose.msra.mxu0 %v739
        %761 = vmatmul.f32.gmra.mxu0 %v733
        %v762 = vpop.f32.mrf.mxu0
        %v763 = vadd.f32 0.0, %v762
        %764 = vmatmul.f32.gmra.mxu0 %v735
        %v765 = vpop.f32.mrf.mxu0
        %v766 = vadd.f32 0.0, %v765
        %767 = vmatmul.f32.gmra.mxu0 %v737
        %v768 = vpop.f32.mrf.mxu0
        %v769 = vadd.f32 0.0, %v768
        %770 = vdwg.mxu0
        %v771 = vmul.f32 %v763, 0.25
        %v772 = vmul.f32 %v766, 0.25
        %v773 = vmul.f32 %v769, 0.25
        %vm774 = vcmask 154624
        %v775 = vsel %vm774, %v771, -inf
        %776 = vmax.xlane.f32.xlu0 %v775
        %v777 = vpop.xlane.xlu0 %776
        %v778 = vsel %vm774, %v772, -inf
        %779 = vmax.xlane.f32.xlu0 %v778
        %v780 = vpop.xlane.xlu0 %779
        %vm781 = vcmask 149504
        %v782 = vsel %vm781, %v773, -inf
        %783 = vmax.xlane.f32.xlu0 %v782
        %v784 = vpop.xlane.xlu0 %783
        %v785 = vsub.f32 %v771, %v777
        %v786 = vsub.f32 %v772, %v780
        %v787 = vsub.f32 %v773, %v784
        %v788 = vmul.f32 %v785, 1.442695
        %v789 = vpow.pop %v788
        %v790 = vmul.f32 %v786, 1.442695
        %v791 = vpow.pop %v790
        %v792 = vmul.f32 %v787, 1.442695
        %v793 = vpow.pop %v792
        %v794 = vsel %vm774, %v789, 0.0
        %795 = vadd.xlane.f32.xlu0 %v794
        %v796 = vpop.xlane.xlu0 %795
        %v797 = vsel %vm774, %v791, 0.0
        %798 = vadd.xlane.f32.xlu0 %v797
        %v799 = vpop.xlane.xlu0 %798
        %v800 = vsel %vm781, %v793, 0.0
        %801 = vadd.xlane.f32.xlu0 %v800
        %v802 = vpop.xlane.xlu0 %801
        %v803 = vrcp.pop %v796
        %v804 = vrcp.pop %v799
        %v805 = vrcp.pop %v802
        %v806 = vmul.f32 %v789, %v803
        %v807 = vmul.f32 %v791, %v804
        %v808 = vmul.f32 %v793, %v805
        %809 = vst.msk [vmem:[%s673] sm:$0xff] %vm774, %v806
        %810 = vst.msk [vmem:[%s673 + $0x8] sm:$0xff] %vm774, %v807
        %811 = vst.msk [vmem:[%s673 + $0x10] sm:$0x7] %vm781, %v808
        %812 = vrot.lane.b32.xlu0 %v715, 96
        %v813 = vpop.permute.xlu0 %812
        %814 = vrot.lane.b32.xlu0 %v718, 96
        %v815 = vpop.permute.xlu0 %814
        %816 = vrot.lane.b32.xlu0 %v721, 96
        %v817 = vpop.permute.xlu0 %816
        %v821 = vsel %vm774, %v806, 0
        %v824 = vsel %vm774, %v807, 0
        %v827 = vsel %vm774, %v808, 0
        %vm829 = vcmask 1042432
        %v830 = vsel %vm829, %v817, 0
        %832 = vmatpush.msra.mxu0 0.0
        %833 = vmatpush.msra.mxu0 0.0
        %834 = vmatpush.msra.mxu0 0.0
        %835 = vmatpush.msra.mxu0 0.0
        %836 = vmatpush.msra.mxu0 0.0
        %837 = vmatpush.msra.mxu0 0.0
        %838 = vmatpush.msra.mxu0 0.0
        %839 = vmatpush.msra.mxu0 0.0
        %840 = vmatpush.msra.mxu0 0.0
        %841 = vmatpush.msra.mxu0 0.0
        %842 = vmatpush.msra.mxu0 0.0
        %843 = vmatpush.msra.mxu0 0.0
        %844 = vmatpush.msra.mxu0 0.0
        %845 = vmatpush.msra.mxu0 %v830
        %846 = vmatpush.msra.mxu0 %v815
        %847 = vmatpush.msra.mxu0 %v813
        %848 = vmatmul.f32.gmra.mxu0 %v821
        %v849 = vpop.f32.mrf.mxu0
        %v850 = vadd.f32 0.0, %v849
        %851 = vmatmul.f32.gmra.mxu0 %v824
        %v852 = vpop.f32.mrf.mxu0
        %v853 = vadd.f32 0.0, %v852
        %854 = vmatmul.f32.gmra.mxu0 %v827
        %v855 = vpop.f32.mrf.mxu0
        %v856 = vadd.f32 0.0, %v855
        %857 = vdwg.mxu0
        %858 = vxpose.xlu0.b32.start [1/16] %v850, 128
        %859 = vxpose.xlu0.b32.cont [2/16] %v853, 128
        %860 = vxpose.xlu0.b32.cont [3/16] %v856, 128
        %861 = vxpose.xlu0.b32.cont [4/16] 0.0, 128
        %862 = vxpose.xlu0.b32.cont [5/16] 0.0, 128
        %863 = vxpose.xlu0.b32.cont [6/16] 0.0, 128
        %864 = vxpose.xlu0.b32.cont [7/16] 0.0, 128
        %865 = vxpose.xlu0.b32.cont [8/16] 0.0, 128
        %866 = vxpose.xlu0.b32.cont [9/16] 0.0, 128
        %867 = vxpose.xlu0.b32.cont [10/16] 0.0, 128
        %868 = vxpose.xlu0.b32.cont [11/16] 0.0, 128
        %869 = vxpose.xlu0.b32.cont [12/16] 0.0, 128
        %870 = vxpose.xlu0.b32.cont [13/16] 0.0, 128
        %871 = vxpose.xlu0.b32.cont [14/16] 0.0, 128
        %872 = vxpose.xlu0.b32.cont [15/16] 0.0, 128
        %873 = vxpose.xlu0.b32.end [16/16] 0.0, 128
        %v874 = vpop.trf.xlu0
        %v875 = vpop.trf.xlu0
        %v876 = vpop.trf.xlu0
        %v877 = vpop.trf.xlu0
        %v878 = vpop.trf.xlu0
        %v879 = vpop.trf.xlu0
        %v880 = vpop.trf.xlu0
        %v881 = vpop.trf.xlu0
        %v882 = vpop.trf.xlu0
        %v883 = vpop.trf.xlu0
        %v884 = vpop.trf.xlu0
        %v885 = vpop.trf.xlu0
        %v886 = vpop.trf.xlu0
        %v887 = vpop.trf.xlu0
        %v888 = vpop.trf.xlu0
        %v889 = vpop.trf.xlu0
        %v890 = vld [vmem:[%s7] sm:$0xff]
        %v891 = vld [vmem:[%s7 + $0x8] sm:$0xff]
        %v892 = vld [vmem:[%s7 + $0x10] sm:$0xff]
        %v893 = vld [vmem:[%s7 + $0x18] sm:$0xff]
        %v894 = vld [vmem:[%s7 + $0x20] sm:$0xff]
        %v895 = vld [vmem:[%s7 + $0x28] sm:$0xff]
        %v896 = vld [vmem:[%s7 + $0x30] sm:$0xff]
        %v897 = vld [vmem:[%s7 + $0x38] sm:$0xff]
        %v898 = vld [vmem:[%s7 + $0x40] sm:$0xff]
        %v899 = vld [vmem:[%s7 + $0x48] sm:$0xff]
        %v900 = vld [vmem:[%s7 + $0x50] sm:$0xff]
        %v901 = vld [vmem:[%s7 + $0x58] sm:$0xff]
        %v902 = vld [vmem:[%s7 + $0x60] sm:$0xff]
        %v903 = vld [vmem:[%s7 + $0x68] sm:$0xff]
        %v904 = vld [vmem:[%s7 + $0x70] sm:$0xff]
        %v905 = vld [vmem:[%s7 + $0x78] sm:$0xff]
        %v906 = vld [vmem:[%s7 + $0x80] sm:$0x7]
        %v907 = vld [vmem:[%s7 + $0x88] sm:$0x7]
        %v908 = vld [vmem:[%s7 + $0x90] sm:$0x7]
        %v909 = vld [vmem:[%s7 + $0x98] sm:$0x7]
        %v910 = vld [vmem:[%s7 + $0xa0] sm:$0x7]
        %v911 = vld [vmem:[%s7 + $0xa8] sm:$0x7]
        %v912 = vld [vmem:[%s7 + $0xb0] sm:$0x7]
        %v913 = vld [vmem:[%s7 + $0xb8] sm:$0x7]
        %v915 = vsel %vm774, %v874, 0
        %v918 = vsel %vm774, %v875, 0
        %v921 = vsel %vm829, %v906, 0
        %v924 = vsel %vm829, %v907, 0
        %v927 = vsel %vm829, %v908, 0
        %v930 = vsel %vm829, %v909, 0
        %v933 = vsel %vm829, %v910, 0
        %v936 = vsel %vm829, %v911, 0
        %v939 = vsel %vm829, %v912, 0
        %v942 = vsel %vm829, %v913, 0
        %944 = vmatpush.msra.mxu0 0.0
        %945 = vmatpush.msra.mxu0 0.0
        %946 = vmatpush.msra.mxu0 0.0
        %947 = vmatpush.msra.mxu0 0.0
        %948 = vmatpush.msra.mxu0 0.0
        %949 = vmatpush.msra.mxu0 0.0
        %950 = vmatpush.msra.mxu0 0.0
        %951 = vmatpush.msra.mxu0 0.0
        %952 = vmatpush.msra.mxu0 0.0
        %953 = vmatpush.msra.mxu0 0.0
        %954 = vmatpush.msra.mxu0 0.0
        %955 = vmatpush.msra.mxu0 0.0
        %956 = vmatpush.msra.mxu0 0.0
        %957 = vmatpush.msra.mxu0 %v921
        %958 = vmatpush.msra.mxu0 %v898
        %959 = vmatpush.msra.mxu0 %v890
        %960 = vmatmul.f32.gmra.mxu0 %v915
        %v961 = vpop.f32.mrf.mxu0
        %v962 = vadd.f32 0.0, %v961
        %963 = vmatmul.f32.gmra.mxu0 %v918
        %v964 = vpop.f32.mrf.mxu0
        %965 = vdwg.mxu0
        %966 = vmatpush.msra.mxu0 0.0
        %967 = vmatpush.msra.mxu0 0.0
        %968 = vmatpush.msra.mxu0 0.0
        %969 = vmatpush.msra.mxu0 0.0
        %970 = vmatpush.msra.mxu0 0.0
        %971 = vmatpush.msra.mxu0 0.0
        %972 = vmatpush.msra.mxu0 0.0
        %973 = vmatpush.msra.mxu0 0.0
        %974 = vmatpush.msra.mxu0 0.0
        %975 = vmatpush.msra.mxu0 0.0
        %976 = vmatpush.msra.mxu0 0.0
        %977 = vmatpush.msra.mxu0 0.0
        %978 = vmatpush.msra.mxu0 0.0
        %979 = vmatpush.msra.mxu0 %v924
        %980 = vmatpush.msra.mxu0 %v899
        %981 = vmatpush.msra.mxu0 %v891
        %982 = vmatmul.f32.gmra.mxu0 %v915
        %v983 = vpop.f32.mrf.mxu0
        %v984 = vadd.f32 0.0, %v983
        %985 = vmatmul.f32.gmra.mxu0 %v918
        %v986 = vpop.f32.mrf.mxu0
        %987 = vdwg.mxu0
        %988 = vmatpush.msra.mxu0 0.0
        %989 = vmatpush.msra.mxu0 0.0
        %990 = vmatpush.msra.mxu0 0.0
        %991 = vmatpush.msra.mxu0 0.0
        %992 = vmatpush.msra.mxu0 0.0
        %993 = vmatpush.msra.mxu0 0.0
        %994 = vmatpush.msra.mxu0 0.0
        %995 = vmatpush.msra.mxu0 0.0
        %996 = vmatpush.msra.mxu0 0.0
        %997 = vmatpush.msra.mxu0 0.0
        %998 = vmatpush.msra.mxu0 0.0
        %999 = vmatpush.msra.mxu0 0.0
        %1000 = vmatpush.msra.mxu0 0.0
        %1001 = vmatpush.msra.mxu0 %v927
        %1002 = vmatpush.msra.mxu0 %v900
        %1003 = vmatpush.msra.mxu0 %v892
        %1004 = vmatmul.f32.gmra.mxu0 %v915
        %v1005 = vpop.f32.mrf.mxu0
        %v1006 = vadd.f32 0.0, %v1005
        %1007 = vmatmul.f32.gmra.mxu0 %v918
        %v1008 = vpop.f32.mrf.mxu0
        %1009 = vdwg.mxu0
        %1010 = vmatpush.msra.mxu0 0.0
        %1011 = vmatpush.msra.mxu0 0.0
        %1012 = vmatpush.msra.mxu0 0.0
        %1013 = vmatpush.msra.mxu0 0.0
        %1014 = vmatpush.msra.mxu0 0.0
        %1015 = vmatpush.msra.mxu0 0.0
        %1016 = vmatpush.msra.mxu0 0.0
        %1017 = vmatpush.msra.mxu0 0.0
        %1018 = vmatpush.msra.mxu0 0.0
        %1019 = vmatpush.msra.mxu0 0.0
        %1020 = vmatpush.msra.mxu0 0.0
        %1021 = vmatpush.msra.mxu0 0.0
        %1022 = vmatpush.msra.mxu0 0.0
        %1023 = vmatpush.msra.mxu0 %v930
        %1024 = vmatpush.msra.mxu0 %v901
        %1025 = vmatpush.msra.mxu0 %v893
        %1026 = vmatmul.f32.gmra.mxu0 %v915
        %v1027 = vpop.f32.mrf.mxu0
        %v1028 = vadd.f32 0.0, %v1027
        %1029 = vmatmul.f32.gmra.mxu0 %v918
        %v1030 = vpop.f32.mrf.mxu0
        %1031 = vdwg.mxu0
        %1032 = vmatpush.msra.mxu0 0.0
        %1033 = vmatpush.msra.mxu0 0.0
        %1034 = vmatpush.msra.mxu0 0.0
        %1035 = vmatpush.msra.mxu0 0.0
        %1036 = vmatpush.msra.mxu0 0.0
        %1037 = vmatpush.msra.mxu0 0.0
        %1038 = vmatpush.msra.mxu0 0.0
        %1039 = vmatpush.msra.mxu0 0.0
        %1040 = vmatpush.msra.mxu0 0.0
        %1041 = vmatpush.msra.mxu0 0.0
        %1042 = vmatpush.msra.mxu0 0.0
        %1043 = vmatpush.msra.mxu0 0.0
        %1044 = vmatpush.msra.mxu0 0.0
        %1045 = vmatpush.msra.mxu0 %v933
        %1046 = vmatpush.msra.mxu0 %v902
        %1047 = vmatpush.msra.mxu0 %v894
        %1048 = vmatmul.f32.gmra.mxu0 %v915
        %v1049 = vpop.f32.mrf.mxu0
        %1050 = vmatmul.f32.gmra.mxu0 %v918
        %v1051 = vpop.f32.mrf.mxu0
        %v1052 = vadd.f32 0.0, %v1051
        %1053 = vdwg.mxu0
        %1054 = vmatpush.msra.mxu0 0.0
        %1055 = vmatpush.msra.mxu0 0.0
        %1056 = vmatpush.msra.mxu0 0.0
        %1057 = vmatpush.msra.mxu0 0.0
        %1058 = vmatpush.msra.mxu0 0.0
        %1059 = vmatpush.msra.mxu0 0.0
        %1060 = vmatpush.msra.mxu0 0.0
        %1061 = vmatpush.msra.mxu0 0.0
        %1062 = vmatpush.msra.mxu0 0.0
        %1063 = vmatpush.msra.mxu0 0.0
        %1064 = vmatpush.msra.mxu0 0.0
        %1065 = vmatpush.msra.mxu0 0.0
        %1066 = vmatpush.msra.mxu0 0.0
        %1067 = vmatpush.msra.mxu0 %v936
        %1068 = vmatpush.msra.mxu0 %v903
        %1069 = vmatpush.msra.mxu0 %v895
        %1070 = vmatmul.f32.gmra.mxu0 %v915
        %v1071 = vpop.f32.mrf.mxu0
        %1072 = vmatmul.f32.gmra.mxu0 %v918
        %v1073 = vpop.f32.mrf.mxu0
        %v1074 = vadd.f32 0.0, %v1073
        %1075 = vdwg.mxu0
        %1076 = vmatpush.msra.mxu0 0.0
        %1077 = vmatpush.msra.mxu0 0.0
        %1078 = vmatpush.msra.mxu0 0.0
        %1079 = vmatpush.msra.mxu0 0.0
        %1080 = vmatpush.msra.mxu0 0.0
        %1081 = vmatpush.msra.mxu0 0.0
        %1082 = vmatpush.msra.mxu0 0.0
        %1083 = vmatpush.msra.mxu0 0.0
        %1084 = vmatpush.msra.mxu0 0.0
        %1085 = vmatpush.msra.mxu0 0.0
        %1086 = vmatpush.msra.mxu0 0.0
        %1087 = vmatpush.msra.mxu0 0.0
        %1088 = vmatpush.msra.mxu0 0.0
        %1089 = vmatpush.msra.mxu0 %v939
        %1090 = vmatpush.msra.mxu0 %v904
        %1091 = vmatpush.msra.mxu0 %v896
        %1092 = vmatmul.f32.gmra.mxu0 %v915
        %v1093 = vpop.f32.mrf.mxu0
        %1094 = vmatmul.f32.gmra.mxu0 %v918
        %v1095 = vpop.f32.mrf.mxu0
        %v1096 = vadd.f32 0.0, %v1095
        %1097 = vdwg.mxu0
        %1098 = vmatpush.msra.mxu0 0.0
        %1099 = vmatpush.msra.mxu0 0.0
        %1100 = vmatpush.msra.mxu0 0.0
        %1101 = vmatpush.msra.mxu0 0.0
        %1102 = vmatpush.msra.mxu0 0.0
        %1103 = vmatpush.msra.mxu0 0.0
        %1104 = vmatpush.msra.mxu0 0.0
        %1105 = vmatpush.msra.mxu0 0.0
        %1106 = vmatpush.msra.mxu0 0.0
        %1107 = vmatpush.msra.mxu0 0.0
        %1108 = vmatpush.msra.mxu0 0.0
        %1109 = vmatpush.msra.mxu0 0.0
        %1110 = vmatpush.msra.mxu0 0.0
        %1111 = vmatpush.msra.mxu0 %v942
        %1112 = vmatpush.msra.mxu0 %v905
        %1113 = vmatpush.msra.mxu0 %v897
        %1114 = vmatmul.f32.gmra.mxu0 %v915
        %v1115 = vpop.f32.mrf.mxu0
        %1116 = vmatmul.f32.gmra.mxu0 %v918
        %v1117 = vpop.f32.mrf.mxu0
        %v1118 = vadd.f32 0.0, %v1117
        %1119 = vdwg.mxu0
        %v1121 = vrot.slane %v962, 1
        %1122 = vrot.lane.b32.xlu0 %v1121, 64
        %v1123 = vpop.permute.xlu0 %1122
        %v1125 = vadd.f32 %v962, %v1123
        %v1127 = vrot.slane %v984, 2
        %v1129 = vadd.f32 %v1125, %v1127
        %v1130 = vrot.slane %v984, 3
        %1131 = vrot.lane.b32.xlu0 %v1130, 64
        %v1132 = vpop.permute.xlu0 %1131
        %v1134 = vadd.f32 %v1129, %v1132
        %v1136 = vrot.slane %v1006, 4
        %v1138 = vadd.f32 %v1134, %v1136
        %v1139 = vrot.slane %v1006, 5
        %1140 = vrot.lane.b32.xlu0 %v1139, 64
        %v1141 = vpop.permute.xlu0 %1140
        %v1143 = vadd.f32 %v1138, %v1141
        %v1145 = vrot.slane %v1028, 6
        %v1147 = vadd.f32 %v1143, %v1145
        %v1148 = vrot.slane %v1028, 7
        %1149 = vrot.lane.b32.xlu0 %v1148, 64
        %v1150 = vpop.permute.xlu0 %1149
        %v1152 = vadd.f32 %v1147, %v1150
        %v1153 = vadd.f32 %v1152, %v1052
        %v1155 = vrot.slane %v1052, 1
        %1156 = vrot.lane.b32.xlu0 %v1155, 64
        %v1157 = vpop.permute.xlu0 %1156
        %v1159 = vadd.f32 %v1153, %v1157
        %v1161 = vrot.slane %v1074, 2
        %v1163 = vadd.f32 %v1159, %v1161
        %v1164 = vrot.slane %v1074, 3
        %1165 = vrot.lane.b32.xlu0 %v1164, 64
        %v1166 = vpop.permute.xlu0 %1165
        %v1168 = vadd.f32 %v1163, %v1166
        %v1170 = vrot.slane %v1096, 4
        %v1172 = vadd.f32 %v1168, %v1170
        %v1173 = vrot.slane %v1096, 5
        %1174 = vrot.lane.b32.xlu0 %v1173, 64
        %v1175 = vpop.permute.xlu0 %1174
        %v1177 = vadd.f32 %v1172, %v1175
        %v1179 = vrot.slane %v1118, 6
        %v1181 = vadd.f32 %v1177, %v1179
        %v1182 = vrot.slane %v1118, 7
        %1183 = vrot.lane.b32.xlu0 %v1182, 64
        %v1184 = vpop.permute.xlu0 %1183
        %v1186 = vadd.f32 %v1181, %v1184
        %v1187 = vld [vmem:[%s655] sm:$0xff]
        %v1188 = vld [vmem:[%s655 + $0x8] sm:$0xff]
        %v1189 = vld [vmem:[%s655 + $0x10] sm:$0xff]
        %v1190 = vld [vmem:[%s655 + $0x18] sm:$0xff]
        %v1191 = vld [vmem:[%s655 + $0x20] sm:$0xff]
        %v1192 = vld [vmem:[%s655 + $0x28] sm:$0xff]
        %v1193 = vld [vmem:[%s655 + $0x30] sm:$0x3]
        %v1194 = vld [vmem:[%s6] sm:$0x1f]
        %v1196 = vsel %vm683, %v1187, 0
        %v1199 = vsel %vm683, %v1188, 0
        %v1202 = vsel %vm683, %v1189, 0
        %v1205 = vsel %vm683, %v1190, 0
        %v1208 = vsel %vm683, %v1191, 0
        %v1211 = vsel %vm683, %v1192, 0
        %v1214 = vsel %vm683, %v1193, 0
        %v1217 = vsel %vm693, %v1194, 0
        %1219 = vmatpush.msra.mxu0 0.0
        %1220 = vmatpush.msra.mxu0 0.0
        %1221 = vmatpush.msra.mxu0 0.0
        %1222 = vmatpush.msra.mxu0 0.0
        %1223 = vmatpush.msra.mxu0 0.0
        %1224 = vmatpush.msra.mxu0 0.0
        %1225 = vmatpush.msra.mxu0 0.0
        %1226 = vmatpush.msra.mxu0 0.0
        %1227 = vmatpush.msra.mxu0 0.0
        %1228 = vmatpush.msra.mxu0 0.0
        %1229 = vmatpush.msra.mxu0 0.0
        %1230 = vmatpush.msra.mxu0 0.0
        %1231 = vmatpush.msra.mxu0 0.0
        %1232 = vmatpush.msra.mxu0 0.0
        %1233 = vmatpush.msra.mxu0 0.0
        %1234 = vmatpush.msra.mxu0 %v1217
        %1235 = vmatmul.f32.gmra.mxu0 %v1196
        %v1236 = vpop.f32.mrf.mxu0
        %v1237 = vadd.f32 0.0, %v1236
        %1238 = vmatmul.f32.gmra.mxu0 %v1199
        %v1239 = vpop.f32.mrf.mxu0
        %v1240 = vadd.f32 0.0, %v1239
        %1241 = vmatmul.f32.gmra.mxu0 %v1202
        %v1242 = vpop.f32.mrf.mxu0
        %v1243 = vadd.f32 0.0, %v1242
        %1244 = vmatmul.f32.gmra.mxu0 %v1205
        %v1245 = vpop.f32.mrf.mxu0
        %v1246 = vadd.f32 0.0, %v1245
        %1247 = vmatmul.f32.gmra.mxu0 %v1208
        %v1248 = vpop.f32.mrf.mxu0
        %v1249 = vadd.f32 0.0, %v1248
        %1250 = vmatmul.f32.gmra.mxu0 %v1211
        %v1251 = vpop.f32.mrf.mxu0
        %v1252 = vadd.f32 0.0, %v1251
        %1253 = vmatmul.f32.gmra.mxu0 %v1214
        %v1254 = vpop.f32.mrf.mxu0
        %v1255 = vadd.f32 0.0, %v1254
        %1256 = vdwg.mxu0
        %1264 = vrot.lane.b32.xlu0 %v1237, 112
        %v1265 = vpop.permute.xlu0 %1264
        %1266 = vrot.lane.b32.xlu0 %v1240, 112
        %v1267 = vpop.permute.xlu0 %1266
        %1268 = vrot.lane.b32.xlu0 %v1243, 112
        %v1269 = vpop.permute.xlu0 %1268
        %1270 = vrot.lane.b32.xlu0 %v1246, 112
        %v1271 = vpop.permute.xlu0 %1270
        %1272 = vrot.lane.b32.xlu0 %v1249, 112
        %v1273 = vpop.permute.xlu0 %1272
        %1274 = vrot.lane.b32.xlu0 %v1252, 112
        %v1275 = vpop.permute.xlu0 %1274
        %1276 = vrot.lane.b32.xlu0 %v1255, 112
        %v1277 = vpop.permute.xlu0 %1276
        %v1278 = vsel %vm732, %v1237, 0
        %v1280 = vsel %vm732, %v1240, 0
        %v1282 = vsel %vm732, %v1243, 0
        %v1284 = vsel %vm732, %v1246, 0
        %v1286 = vsel %vm732, %v1249, 0
        %v1288 = vsel %vm732, %v1252, 0
        %v1290 = vsel %vm732, %v1255, 0
        %v1292 = vsel %vm732, %v1265, 0
        %v1294 = vsel %vm732, %v1267, 0
        %v1296 = vsel %vm732, %v1269, 0
        %v1298 = vsel %vm732, %v1271, 0
        %v1300 = vsel %vm732, %v1273, 0
        %v1302 = vsel %vm732, %v1275, 0
        %v1304 = vsel %vm732, %v1277, 0
        %1306 = vmatpush.xpose.msra.mxu0 0.0
        %1307 = vmatpush.xpose.msra.mxu0 0.0
        %1308 = vmatpush.xpose.msra.mxu0 0.0
        %1309 = vmatpush.xpose.msra.mxu0 0.0
        %1310 = vmatpush.xpose.msra.mxu0 0.0
        %1311 = vmatpush.xpose.msra.mxu0 0.0
        %1312 = vmatpush.xpose.msra.mxu0 0.0
        %1313 = vmatpush.xpose.msra.mxu0 0.0
        %1314 = vmatpush.xpose.msra.mxu0 0.0
        %1315 = vmatpush.xpose.msra.mxu0 %v1304
        %1316 = vmatpush.xpose.msra.mxu0 %v1302
        %1317 = vmatpush.xpose.msra.mxu0 %v1300
        %1318 = vmatpush.xpose.msra.mxu0 %v1298
        %1319 = vmatpush.xpose.msra.mxu0 %v1296
        %1320 = vmatpush.xpose.msra.mxu0 %v1294
        %1321 = vmatpush.xpose.msra.mxu0 %v1292
        %1322 = vmatmul.f32.gmra.mxu0 %v1278
        %v1323 = vpop.f32.mrf.mxu0
        %v1324 = vadd.f32 0.0, %v1323
        %1325 = vmatmul.f32.gmra.mxu0 %v1280
        %v1326 = vpop.f32.mrf.mxu0
        %v1327 = vadd.f32 0.0, %v1326
        %1328 = vmatmul.f32.gmra.mxu0 %v1282
        %v1329 = vpop.f32.mrf.mxu0
        %v1330 = vadd.f32 0.0, %v1329
        %1331 = vmatmul.f32.gmra.mxu0 %v1284
        %v1332 = vpop.f32.mrf.mxu0
        %v1333 = vadd.f32 0.0, %v1332
        %1334 = vmatmul.f32.gmra.mxu0 %v1286
        %v1335 = vpop.f32.mrf.mxu0
        %v1336 = vadd.f32 0.0, %v1335
        %1337 = vmatmul.f32.gmra.mxu0 %v1288
        %v1338 = vpop.f32.mrf.mxu0
        %v1339 = vadd.f32 0.0, %v1338
        %1340 = vmatmul.f32.gmra.mxu0 %v1290
        %v1341 = vpop.f32.mrf.mxu0
        %v1342 = vadd.f32 0.0, %v1341
        %1343 = vdwg.mxu0
        %v1344 = vmul.f32 %v1324, 0.25
        %v1345 = vmul.f32 %v1327, 0.25
        %v1346 = vmul.f32 %v1330, 0.25
        %v1347 = vmul.f32 %v1333, 0.25
        %v1348 = vmul.f32 %v1336, 0.25
        %v1349 = vmul.f32 %v1339, 0.25
        %v1350 = vmul.f32 %v1342, 0.25
        %vm1351 = vcmask 408576
        %v1352 = vsel %vm1351, %v1344, -inf
        %1353 = vmax.xlane.f32.xlu0 %v1352
        %v1354 = vpop.xlane.xlu0 %1353
        %v1355 = vsel %vm1351, %v1345, -inf
        %1356 = vmax.xlane.f32.xlu0 %v1355
        %v1357 = vpop.xlane.xlu0 %1356
        %v1358 = vsel %vm1351, %v1346, -inf
        %1359 = vmax.xlane.f32.xlu0 %v1358
        %v1360 = vpop.xlane.xlu0 %1359
        %v1361 = vsel %vm1351, %v1347, -inf
        %1362 = vmax.xlane.f32.xlu0 %v1361
        %v1363 = vpop.xlane.xlu0 %1362
        %v1364 = vsel %vm1351, %v1348, -inf
        %1365 = vmax.xlane.f32.xlu0 %v1364
        %v1366 = vpop.xlane.xlu0 %1365
        %v1367 = vsel %vm1351, %v1349, -inf
        %1368 = vmax.xlane.f32.xlu0 %v1367
        %v1369 = vpop.xlane.xlu0 %1368
        %vm1370 = vcmask 402432
        %v1371 = vsel %vm1370, %v1350, -inf
        %1372 = vmax.xlane.f32.xlu0 %v1371
        %v1373 = vpop.xlane.xlu0 %1372
        %v1374 = vsub.f32 %v1344, %v1354
        %v1375 = vsub.f32 %v1345, %v1357
        %v1376 = vsub.f32 %v1346, %v1360
        %v1377 = vsub.f32 %v1347, %v1363
        %v1378 = vsub.f32 %v1348, %v1366
        %v1379 = vsub.f32 %v1349, %v1369
        %v1380 = vsub.f32 %v1350, %v1373
        %v1381 = vmul.f32 %v1374, 1.442695
        %v1382 = vpow.pop %v1381
        %v1383 = vmul.f32 %v1375, 1.442695
        %v1384 = vpow.pop %v1383
        %v1385 = vmul.f32 %v1376, 1.442695
        %v1386 = vpow.pop %v1385
        %v1387 = vmul.f32 %v1377, 1.442695
        %v1388 = vpow.pop %v1387
        %v1389 = vmul.f32 %v1378, 1.442695
        %v1390 = vpow.pop %v1389
        %v1391 = vmul.f32 %v1379, 1.442695
        %v1392 = vpow.pop %v1391
        %v1393 = vmul.f32 %v1380, 1.442695
        %v1394 = vpow.pop %v1393
        %v1395 = vsel %vm1351, %v1382, 0.0
        %1396 = vadd.xlane.f32.xlu0 %v1395
        %v1397 = vpop.xlane.xlu0 %1396
        %v1398 = vsel %vm1351, %v1384, 0.0
        %1399 = vadd.xlane.f32.xlu0 %v1398
        %v1400 = vpop.xlane.xlu0 %1399
        %v1401 = vsel %vm1351, %v1386, 0.0
        %1402 = vadd.xlane.f32.xlu0 %v1401
        %v1403 = vpop.xlane.xlu0 %1402
        %v1404 = vsel %vm1351, %v1388, 0.0
        %1405 = vadd.xlane.f32.xlu0 %v1404
        %v1406 = vpop.xlane.xlu0 %1405
        %v1407 = vsel %vm1351, %v1390, 0.0
        %1408 = vadd.xlane.f32.xlu0 %v1407
        %v1409 = vpop.xlane.xlu0 %1408
        %v1410 = vsel %vm1351, %v1392, 0.0
        %1411 = vadd.xlane.f32.xlu0 %v1410
        %v1412 = vpop.xlane.xlu0 %1411
        %v1413 = vsel %vm1370, %v1394, 0.0
        %1414 = vadd.xlane.f32.xlu0 %v1413
        %v1415 = vpop.xlane.xlu0 %1414
        %v1416 = vrcp.pop %v1397
        %v1417 = vrcp.pop %v1400
        %v1418 = vrcp.pop %v1403
        %v1419 = vrcp.pop %v1406
        %v1420 = vrcp.pop %v1409
        %v1421 = vrcp.pop %v1412
        %v1422 = vrcp.pop %v1415
        %v1423 = vmul.f32 %v1382, %v1416
        %v1424 = vmul.f32 %v1384, %v1417
        %v1425 = vmul.f32 %v1386, %v1418
        %v1426 = vmul.f32 %v1388, %v1419
        %v1427 = vmul.f32 %v1390, %v1420
        %v1428 = vmul.f32 %v1392, %v1421
        %v1429 = vmul.f32 %v1394, %v1422
        %1430 = vst.msk [vmem:[%s678] sm:$0xff] %vm1351, %v1423
        %1431 = vst.msk [vmem:[%s678 + $0x8] sm:$0xff] %vm1351, %v1424
        %1432 = vst.msk [vmem:[%s678 + $0x10] sm:$0xff] %vm1351, %v1425
        %1433 = vst.msk [vmem:[%s678 + $0x18] sm:$0xff] %vm1351, %v1426
        %1434 = vst.msk [vmem:[%s678 + $0x20] sm:$0xff] %vm1351, %v1427
        %1435 = vst.msk [vmem:[%s678 + $0x28] sm:$0xff] %vm1351, %v1428
        %1436 = vst.msk [vmem:[%s678 + $0x30] sm:$0x3] %vm1370, %v1429
        %1437 = vrot.lane.b32.xlu0 %v1237, 96
        %v1438 = vpop.permute.xlu0 %1437
        %1439 = vrot.lane.b32.xlu0 %v1240, 96
        %v1440 = vpop.permute.xlu0 %1439
        %1441 = vrot.lane.b32.xlu0 %v1243, 96
        %v1442 = vpop.permute.xlu0 %1441
        %1443 = vrot.lane.b32.xlu0 %v1246, 96
        %v1444 = vpop.permute.xlu0 %1443
        %1445 = vrot.lane.b32.xlu0 %v1249, 96
        %v1446 = vpop.permute.xlu0 %1445
        %1447 = vrot.lane.b32.xlu0 %v1252, 96
        %v1448 = vpop.permute.xlu0 %1447
        %1449 = vrot.lane.b32.xlu0 %v1255, 96
        %v1450 = vpop.permute.xlu0 %1449
        %v1458 = vsel %vm1351, %v1423, 0
        %v1461 = vsel %vm1351, %v1424, 0
        %v1464 = vsel %vm1351, %v1425, 0
        %v1467 = vsel %vm1351, %v1426, 0
        %v1470 = vsel %vm1351, %v1427, 0
        %v1473 = vsel %vm1351, %v1428, 0
        %v1476 = vsel %vm1351, %v1429, 0
        %vm1478 = vcmask 1041408
        %v1479 = vsel %vm1478, %v1450, 0
        %1481 = vmatpush.msra.mxu0 0.0
        %1482 = vmatpush.msra.mxu0 0.0
        %1483 = vmatpush.msra.mxu0 0.0
        %1484 = vmatpush.msra.mxu0 0.0
        %1485 = vmatpush.msra.mxu0 0.0
        %1486 = vmatpush.msra.mxu0 0.0
        %1487 = vmatpush.msra.mxu0 0.0
        %1488 = vmatpush.msra.mxu0 0.0
        %1489 = vmatpush.msra.mxu0 0.0
        %1490 = vmatpush.msra.mxu0 %v1479
        %1491 = vmatpush.msra.mxu0 %v1448
        %1492 = vmatpush.msra.mxu0 %v1446
        %1493 = vmatpush.msra.mxu0 %v1444
        %1494 = vmatpush.msra.mxu0 %v1442
        %1495 = vmatpush.msra.mxu0 %v1440
        %1496 = vmatpush.msra.mxu0 %v1438
        %1497 = vmatmul.f32.gmra.mxu0 %v1458
        %v1498 = vpop.f32.mrf.mxu0
        %v1499 = vadd.f32 0.0, %v1498
        %1500 = vmatmul.f32.gmra.mxu0 %v1461
        %v1501 = vpop.f32.mrf.mxu0
        %v1502 = vadd.f32 0.0, %v1501
        %1503 = vmatmul.f32.gmra.mxu0 %v1464
        %v1504 = vpop.f32.mrf.mxu0
        %v1505 = vadd.f32 0.0, %v1504
        %1506 = vmatmul.f32.gmra.mxu0 %v1467
        %v1507 = vpop.f32.mrf.mxu0
        %v1508 = vadd.f32 0.0, %v1507
        %1509 = vmatmul.f32.gmra.mxu0 %v1470
        %v1510 = vpop.f32.mrf.mxu0
        %v1511 = vadd.f32 0.0, %v1510
        %1512 = vmatmul.f32.gmra.mxu0 %v1473
        %v1513 = vpop.f32.mrf.mxu0
        %v1514 = vadd.f32 0.0, %v1513
        %1515 = vmatmul.f32.gmra.mxu0 %v1476
        %v1516 = vpop.f32.mrf.mxu0
        %v1517 = vadd.f32 0.0, %v1516
        %1518 = vdwg.mxu0
        %1519 = vxpose.xlu0.b32.start [1/16] %v1499, 128
        %1520 = vxpose.xlu0.b32.cont [2/16] %v1502, 128
        %1521 = vxpose.xlu0.b32.cont [3/16] %v1505, 128
        %1522 = vxpose.xlu0.b32.cont [4/16] %v1508, 128
        %1523 = vxpose.xlu0.b32.cont [5/16] %v1511, 128
        %1524 = vxpose.xlu0.b32.cont [6/16] %v1514, 128
        %1525 = vxpose.xlu0.b32.cont [7/16] %v1517, 128
        %1526 = vxpose.xlu0.b32.cont [8/16] 0.0, 128
        %1527 = vxpose.xlu0.b32.cont [9/16] 0.0, 128
        %1528 = vxpose.xlu0.b32.cont [10/16] 0.0, 128
        %1529 = vxpose.xlu0.b32.cont [11/16] 0.0, 128
        %1530 = vxpose.xlu0.b32.cont [12/16] 0.0, 128
        %1531 = vxpose.xlu0.b32.cont [13/16] 0.0, 128
        %1532 = vxpose.xlu0.b32.cont [14/16] 0.0, 128
        %1533 = vxpose.xlu0.b32.cont [15/16] 0.0, 128
        %1534 = vxpose.xlu0.b32.end [16/16] 0.0, 128
        %v1535 = vpop.trf.xlu0
        %v1536 = vpop.trf.xlu0
        %v1537 = vpop.trf.xlu0
        %v1538 = vpop.trf.xlu0
        %v1539 = vpop.trf.xlu0
        %v1540 = vpop.trf.xlu0
        %v1541 = vpop.trf.xlu0
        %v1542 = vpop.trf.xlu0
        %v1543 = vpop.trf.xlu0
        %v1544 = vpop.trf.xlu0
        %v1545 = vpop.trf.xlu0
        %v1546 = vpop.trf.xlu0
        %v1547 = vpop.trf.xlu0
        %v1548 = vpop.trf.xlu0
        %v1549 = vpop.trf.xlu0
        %v1550 = vpop.trf.xlu0
        %v1551 = vld [vmem:[#allocation2] sm:$0xff]
        %v1552 = vld [vmem:[#allocation2 + $0x8] sm:$0xff]
        %v1553 = vld [vmem:[#allocation2 + $0x10] sm:$0xff]
        %v1554 = vld [vmem:[#allocation2 + $0x18] sm:$0xff]
        %v1555 = vld [vmem:[#allocation2 + $0x20] sm:$0xff]
        %v1556 = vld [vmem:[#allocation2 + $0x28] sm:$0xff]
        %v1557 = vld [vmem:[#allocation2 + $0x30] sm:$0xff]
        %v1558 = vld [vmem:[#allocation2 + $0x38] sm:$0xff]
        %v1559 = vld [vmem:[#allocation2 + $0x40] sm:$0xff]
        %v1560 = vld [vmem:[#allocation2 + $0x48] sm:$0xff]
        %v1561 = vld [vmem:[#allocation2 + $0x50] sm:$0xff]
        %v1562 = vld [vmem:[#allocation2 + $0x58] sm:$0xff]
        %v1563 = vld [vmem:[#allocation2 + $0x60] sm:$0xff]
        %v1564 = vld [vmem:[#allocation2 + $0x68] sm:$0xff]
        %v1565 = vld [vmem:[#allocation2 + $0x70] sm:$0xff]
        %v1566 = vld [vmem:[#allocation2 + $0x78] sm:$0xff]
        %v1567 = vld [vmem:[#allocation2 + $0x80] sm:$0xff]
        %v1568 = vld [vmem:[#allocation2 + $0x88] sm:$0xff]
        %v1569 = vld [vmem:[#allocation2 + $0x90] sm:$0xff]
        %v1570 = vld [vmem:[#allocation2 + $0x98] sm:$0xff]
        %v1571 = vld [vmem:[#allocation2 + $0xa0] sm:$0xff]
        %v1572 = vld [vmem:[#allocation2 + $0xa8] sm:$0xff]
        %v1573 = vld [vmem:[#allocation2 + $0xb0] sm:$0xff]
        %v1574 = vld [vmem:[#allocation2 + $0xb8] sm:$0xff]
        %v1575 = vld [vmem:[#allocation2 + $0xc0] sm:$0xff]
        %v1576 = vld [vmem:[#allocation2 + $0xc8] sm:$0xff]
        %v1577 = vld [vmem:[#allocation2 + $0xd0] sm:$0xff]
        %v1578 = vld [vmem:[#allocation2 + $0xd8] sm:$0xff]
        %v1579 = vld [vmem:[#allocation2 + $0xe0] sm:$0xff]
        %v1580 = vld [vmem:[#allocation2 + $0xe8] sm:$0xff]
        %v1581 = vld [vmem:[#allocation2 + $0xf0] sm:$0xff]
        %v1582 = vld [vmem:[#allocation2 + $0xf8] sm:$0xff]
        %v1583 = vld [vmem:[#allocation2 + $0x100] sm:$0xff]
        %v1584 = vld [vmem:[#allocation2 + $0x108] sm:$0xff]
        %v1585 = vld [vmem:[#allocation2 + $0x110] sm:$0xff]
        %v1586 = vld [vmem:[#allocation2 + $0x118] sm:$0xff]
        %v1587 = vld [vmem:[#allocation2 + $0x120] sm:$0xff]
        %v1588 = vld [vmem:[#allocation2 + $0x128] sm:$0xff]
        %v1589 = vld [vmem:[#allocation2 + $0x130] sm:$0xff]
        %v1590 = vld [vmem:[#allocation2 + $0x138] sm:$0xff]
        %v1591 = vld [vmem:[#allocation2 + $0x140] sm:$0xff]
        %v1592 = vld [vmem:[#allocation2 + $0x148] sm:$0xff]
        %v1593 = vld [vmem:[#allocation2 + $0x150] sm:$0xff]
        %v1594 = vld [vmem:[#allocation2 + $0x158] sm:$0xff]
        %v1595 = vld [vmem:[#allocation2 + $0x160] sm:$0xff]
        %v1596 = vld [vmem:[#allocation2 + $0x168] sm:$0xff]
        %v1597 = vld [vmem:[#allocation2 + $0x170] sm:$0xff]
        %v1598 = vld [vmem:[#allocation2 + $0x178] sm:$0xff]
        %v1599 = vld [vmem:[#allocation2 + $0x180] sm:$0x3]
        %v1600 = vld [vmem:[#allocation2 + $0x188] sm:$0x3]
        %v1601 = vld [vmem:[#allocation2 + $0x190] sm:$0x3]
        %v1602 = vld [vmem:[#allocation2 + $0x198] sm:$0x3]
        %v1603 = vld [vmem:[#allocation2 + $0x1a0] sm:$0x3]
        %v1604 = vld [vmem:[#allocation2 + $0x1a8] sm:$0x3]
        %v1605 = vld [vmem:[#allocation2 + $0x1b0] sm:$0x3]
        %v1606 = vld [vmem:[#allocation2 + $0x1b8] sm:$0x3]
        %v1608 = vsel %vm1351, %v1535, 0
        %v1611 = vsel %vm1351, %v1536, 0
        %v1614 = vsel %vm1478, %v1599, 0
        %v1617 = vsel %vm1478, %v1600, 0
        %v1620 = vsel %vm1478, %v1601, 0
        %v1623 = vsel %vm1478, %v1602, 0
        %v1626 = vsel %vm1478, %v1603, 0
        %v1629 = vsel %vm1478, %v1604, 0
        %v1632 = vsel %vm1478, %v1605, 0
        %v1635 = vsel %vm1478, %v1606, 0
        %1637 = vmatpush.msra.mxu0 0.0
        %1638 = vmatpush.msra.mxu0 0.0
        %1639 = vmatpush.msra.mxu0 0.0
        %1640 = vmatpush.msra.mxu0 0.0
        %1641 = vmatpush.msra.mxu0 0.0
        %1642 = vmatpush.msra.mxu0 0.0
        %1643 = vmatpush.msra.mxu0 0.0
        %1644 = vmatpush.msra.mxu0 0.0
        %1645 = vmatpush.msra.mxu0 0.0
        %1646 = vmatpush.msra.mxu0 %v1614
        %1647 = vmatpush.msra.mxu0 %v1591
        %1648 = vmatpush.msra.mxu0 %v1583
        %1649 = vmatpush.msra.mxu0 %v1575
        %1650 = vmatpush.msra.mxu0 %v1567
        %1651 = vmatpush.msra.mxu0 %v1559
        %1652 = vmatpush.msra.mxu0 %v1551
        %1653 = vmatmul.f32.gmra.mxu0 %v1608
        %v1654 = vpop.f32.mrf.mxu0
        %v1655 = vadd.f32 0.0, %v1654
        %1656 = vmatmul.f32.gmra.mxu0 %v1611
        %v1657 = vpop.f32.mrf.mxu0
        %1658 = vdwg.mxu0
        %1659 = vmatpush.msra.mxu0 0.0
        %1660 = vmatpush.msra.mxu0 0.0
        %1661 = vmatpush.msra.mxu0 0.0
        %1662 = vmatpush.msra.mxu0 0.0
        %1663 = vmatpush.msra.mxu0 0.0
        %1664 = vmatpush.msra.mxu0 0.0
        %1665 = vmatpush.msra.mxu0 0.0
        %1666 = vmatpush.msra.mxu0 0.0
        %1667 = vmatpush.msra.mxu0 0.0
        %1668 = vmatpush.msra.mxu0 %v1617
        %1669 = vmatpush.msra.mxu0 %v1592
        %1670 = vmatpush.msra.mxu0 %v1584
        %1671 = vmatpush.msra.mxu0 %v1576
        %1672 = vmatpush.msra.mxu0 %v1568
        %1673 = vmatpush.msra.mxu0 %v1560
        %1674 = vmatpush.msra.mxu0 %v1552
        %1675 = vmatmul.f32.gmra.mxu0 %v1608
        %v1676 = vpop.f32.mrf.mxu0
        %v1677 = vadd.f32 0.0, %v1676
        %1678 = vmatmul.f32.gmra.mxu0 %v1611
        %v1679 = vpop.f32.mrf.mxu0
        %1680 = vdwg.mxu0
        %1681 = vmatpush.msra.mxu0 0.0
        %1682 = vmatpush.msra.mxu0 0.0
        %1683 = vmatpush.msra.mxu0 0.0
        %1684 = vmatpush.msra.mxu0 0.0
        %1685 = vmatpush.msra.mxu0 0.0
        %1686 = vmatpush.msra.mxu0 0.0
        %1687 = vmatpush.msra.mxu0 0.0
        %1688 = vmatpush.msra.mxu0 0.0
        %1689 = vmatpush.msra.mxu0 0.0
        %1690 = vmatpush.msra.mxu0 %v1620
        %1691 = vmatpush.msra.mxu0 %v1593
        %1692 = vmatpush.msra.mxu0 %v1585
        %1693 = vmatpush.msra.mxu0 %v1577
        %1694 = vmatpush.msra.mxu0 %v1569
        %1695 = vmatpush.msra.mxu0 %v1561
        %1696 = vmatpush.msra.mxu0 %v1553
        %1697 = vmatmul.f32.gmra.mxu0 %v1608
        %v1698 = vpop.f32.mrf.mxu0
        %v1699 = vadd.f32 0.0, %v1698
        %1700 = vmatmul.f32.gmra.mxu0 %v1611
        %v1701 = vpop.f32.mrf.mxu0
        %1702 = vdwg.mxu0
        %1703 = vmatpush.msra.mxu0 0.0
        %1704 = vmatpush.msra.mxu0 0.0
        %1705 = vmatpush.msra.mxu0 0.0
        %1706 = vmatpush.msra.mxu0 0.0
        %1707 = vmatpush.msra.mxu0 0.0
        %1708 = vmatpush.msra.mxu0 0.0
        %1709 = vmatpush.msra.mxu0 0.0
        %1710 = vmatpush.msra.mxu0 0.0
        %1711 = vmatpush.msra.mxu0 0.0
        %1712 = vmatpush.msra.mxu0 %v1623
        %1713 = vmatpush.msra.mxu0 %v1594
        %1714 = vmatpush.msra.mxu0 %v1586
        %1715 = vmatpush.msra.mxu0 %v1578
        %1716 = vmatpush.msra.mxu0 %v1570
        %1717 = vmatpush.msra.mxu0 %v1562
        %1718 = vmatpush.msra.mxu0 %v1554
        %1719 = vmatmul.f32.gmra.mxu0 %v1608
        %v1720 = vpop.f32.mrf.mxu0
        %v1721 = vadd.f32 0.0, %v1720
        %1722 = vmatmul.f32.gmra.mxu0 %v1611
        %v1723 = vpop.f32.mrf.mxu0
        %1724 = vdwg.mxu0
        %1725 = vmatpush.msra.mxu0 0.0
        %1726 = vmatpush.msra.mxu0 0.0
        %1727 = vmatpush.msra.mxu0 0.0
        %1728 = vmatpush.msra.mxu0 0.0
        %1729 = vmatpush.msra.mxu0 0.0
        %1730 = vmatpush.msra.mxu0 0.0
        %1731 = vmatpush.msra.mxu0 0.0
        %1732 = vmatpush.msra.mxu0 0.0
        %1733 = vmatpush.msra.mxu0 0.0
        %1734 = vmatpush.msra.mxu0 %v1626
        %1735 = vmatpush.msra.mxu0 %v1595
        %1736 = vmatpush.msra.mxu0 %v1587
        %1737 = vmatpush.msra.mxu0 %v1579
        %1738 = vmatpush.msra.mxu0 %v1571
        %1739 = vmatpush.msra.mxu0 %v1563
        %1740 = vmatpush.msra.mxu0 %v1555
        %1741 = vmatmul.f32.gmra.mxu0 %v1608
        %v1742 = vpop.f32.mrf.mxu0
        %1743 = vmatmul.f32.gmra.mxu0 %v1611
        %v1744 = vpop.f32.mrf.mxu0
        %v1745 = vadd.f32 0.0, %v1744
        %1746 = vdwg.mxu0
        %1747 = vmatpush.msra.mxu0 0.0
        %1748 = vmatpush.msra.mxu0 0.0
        %1749 = vmatpush.msra.mxu0 0.0
        %1750 = vmatpush.msra.mxu0 0.0
        %1751 = vmatpush.msra.mxu0 0.0
        %1752 = vmatpush.msra.mxu0 0.0
        %1753 = vmatpush.msra.mxu0 0.0
        %1754 = vmatpush.msra.mxu0 0.0
        %1755 = vmatpush.msra.mxu0 0.0
        %1756 = vmatpush.msra.mxu0 %v1629
        %1757 = vmatpush.msra.mxu0 %v1596
        %1758 = vmatpush.msra.mxu0 %v1588
        %1759 = vmatpush.msra.mxu0 %v1580
        %1760 = vmatpush.msra.mxu0 %v1572
        %1761 = vmatpush.msra.mxu0 %v1564
        %1762 = vmatpush.msra.mxu0 %v1556
        %1763 = vmatmul.f32.gmra.mxu0 %v1608
        %v1764 = vpop.f32.mrf.mxu0
        %1765 = vmatmul.f32.gmra.mxu0 %v1611
        %v1766 = vpop.f32.mrf.mxu0
        %v1767 = vadd.f32 0.0, %v1766
        %1768 = vdwg.mxu0
        %1769 = vmatpush.msra.mxu0 0.0
        %1770 = vmatpush.msra.mxu0 0.0
        %1771 = vmatpush.msra.mxu0 0.0
        %1772 = vmatpush.msra.mxu0 0.0
        %1773 = vmatpush.msra.mxu0 0.0
        %1774 = vmatpush.msra.mxu0 0.0
        %1775 = vmatpush.msra.mxu0 0.0
        %1776 = vmatpush.msra.mxu0 0.0
        %1777 = vmatpush.msra.mxu0 0.0
        %1778 = vmatpush.msra.mxu0 %v1632
        %1779 = vmatpush.msra.mxu0 %v1597
        %1780 = vmatpush.msra.mxu0 %v1589
        %1781 = vmatpush.msra.mxu0 %v1581
        %1782 = vmatpush.msra.mxu0 %v1573
        %1783 = vmatpush.msra.mxu0 %v1565
        %1784 = vmatpush.msra.mxu0 %v1557
        %1785 = vmatmul.f32.gmra.mxu0 %v1608
        %v1786 = vpop.f32.mrf.mxu0
        %1787 = vmatmul.f32.gmra.mxu0 %v1611
        %v1788 = vpop.f32.mrf.mxu0
        %v1789 = vadd.f32 0.0, %v1788
        %1790 = vdwg.mxu0
        %1791 = vmatpush.msra.mxu0 0.0
        %1792 = vmatpush.msra.mxu0 0.0
        %1793 = vmatpush.msra.mxu0 0.0
        %1794 = vmatpush.msra.mxu0 0.0
        %1795 = vmatpush.msra.mxu0 0.0
        %1796 = vmatpush.msra.mxu0 0.0
        %1797 = vmatpush.msra.mxu0 0.0
        %1798 = vmatpush.msra.mxu0 0.0
        %1799 = vmatpush.msra.mxu0 0.0
        %1800 = vmatpush.msra.mxu0 %v1635
        %1801 = vmatpush.msra.mxu0 %v1598
        %1802 = vmatpush.msra.mxu0 %v1590
        %1803 = vmatpush.msra.mxu0 %v1582
        %1804 = vmatpush.msra.mxu0 %v1574
        %1805 = vmatpush.msra.mxu0 %v1566
        %1806 = vmatpush.msra.mxu0 %v1558
        %1807 = vmatmul.f32.gmra.mxu0 %v1608
        %v1808 = vpop.f32.mrf.mxu0
        %1809 = vmatmul.f32.gmra.mxu0 %v1611
        %v1810 = vpop.f32.mrf.mxu0
        %v1811 = vadd.f32 0.0, %v1810
        %1812 = vdwg.mxu0
        %v1814 = vrot.slane %v1655, 1
        %1815 = vrot.lane.b32.xlu0 %v1814, 64
        %v1816 = vpop.permute.xlu0 %1815
        %v1818 = vadd.f32 %v1655, %v1816
        %v1820 = vrot.slane %v1677, 2
        %v1822 = vadd.f32 %v1818, %v1820
        %v1823 = vrot.slane %v1677, 3
        %1824 = vrot.lane.b32.xlu0 %v1823, 64
        %v1825 = vpop.permute.xlu0 %1824
        %v1827 = vadd.f32 %v1822, %v1825
        %v1829 = vrot.slane %v1699, 4
        %v1831 = vadd.f32 %v1827, %v1829
        %v1832 = vrot.slane %v1699, 5
        %1833 = vrot.lane.b32.xlu0 %v1832, 64
        %v1834 = vpop.permute.xlu0 %1833
        %v1836 = vadd.f32 %v1831, %v1834
        %v1838 = vrot.slane %v1721, 6
        %v1840 = vadd.f32 %v1836, %v1838
        %v1841 = vrot.slane %v1721, 7
        %1842 = vrot.lane.b32.xlu0 %v1841, 64
        %v1843 = vpop.permute.xlu0 %1842
        %v1845 = vadd.f32 %v1840, %v1843
        %v1846 = vadd.f32 %v1845, %v1745
        %v1848 = vrot.slane %v1745, 1
        %1849 = vrot.lane.b32.xlu0 %v1848, 64
        %v1850 = vpop.permute.xlu0 %1849
        %v1852 = vadd.f32 %v1846, %v1850
        %v1854 = vrot.slane %v1767, 2
        %v1856 = vadd.f32 %v1852, %v1854
        %v1857 = vrot.slane %v1767, 3
        %1858 = vrot.lane.b32.xlu0 %v1857, 64
        %v1859 = vpop.permute.xlu0 %1858
        %v1861 = vadd.f32 %v1856, %v1859
        %v1863 = vrot.slane %v1789, 4
        %v1865 = vadd.f32 %v1861, %v1863
        %v1866 = vrot.slane %v1789, 5
        %1867 = vrot.lane.b32.xlu0 %v1866, 64
        %v1868 = vpop.permute.xlu0 %1867
        %v1870 = vadd.f32 %v1865, %v1868
        %v1872 = vrot.slane %v1811, 6
        %v1874 = vadd.f32 %v1870, %v1872
        %v1875 = vrot.slane %v1811, 7
        %1876 = vrot.lane.b32.xlu0 %v1875, 64
        %v1877 = vpop.permute.xlu0 %1876
        %v1879 = vadd.f32 %v1874, %v1877
        %v1880 = vld [vmem:[%s660] sm:$0xff]
        %v1881 = vld [vmem:[%s660 + $0x8] sm:$0xff]
        %v1882 = vld [vmem:[%s660 + $0x10] sm:$0x7]
        %vm1883 = vcmask 261120
        %v1884 = vsel %vm1883, %v1880, 0.0
        %v1885 = vsel %vm1883, %v1881, 0.0
        %v1886 = vadd.f32 %v1884, %v1885
        %vm1887 = vcmask 256000
        %v1888 = vsel %vm1887, %v1882, 0.0
        %v1889 = vadd.f32 %v1886, %v1888
        %v1890 = vrot.slane %v1889, 4
        %v1891 = vadd.f32 %v1889, %v1890
        %v1892 = vrot.slane %v1891, 2
        %v1893 = vadd.f32 %v1891, %v1892
        %v1894 = vrot.slane %v1893, 1
        %v1895 = vadd.f32 %v1893, %v1894
        %v1896 = vmul.f32 %v1895, 0.05263158
        %v1897 = vld [vmem:[%s665] sm:$0xff]
        %v1898 = vld [vmem:[%s665 + $0x8] sm:$0xff]
        %v1899 = vld [vmem:[%s665 + $0x10] sm:$0xff]
        %v1900 = vld [vmem:[%s665 + $0x18] sm:$0xff]
        %v1901 = vld [vmem:[%s665 + $0x20] sm:$0xff]
        %v1902 = vld [vmem:[%s665 + $0x28] sm:$0xff]
        %v1903 = vld [vmem:[%s665 + $0x30] sm:$0x3]
        %v1904 = vsel %vm1883, %v1897, 0.0
        %v1905 = vsel %vm1883, %v1898, 0.0
        %v1906 = vadd.f32 %v1904, %v1905
        %v1907 = vsel %vm1883, %v1899, 0.0
        %v1908 = vadd.f32 %v1906, %v1907
        %v1909 = vsel %vm1883, %v1900, 0.0
        %v1910 = vadd.f32 %v1908, %v1909
        %v1911 = vsel %vm1883, %v1901, 0.0
        %v1912 = vadd.f32 %v1910, %v1911
        %v1913 = vsel %vm1883, %v1902, 0.0
        %v1914 = vadd.f32 %v1912, %v1913
        %vm1915 = vcmask 254976
        %v1916 = vsel %vm1915, %v1903, 0.0
        %v1917 = vadd.f32 %v1914, %v1916
        %v1918 = vrot.slane %v1917, 4
        %v1919 = vadd.f32 %v1917, %v1918
        %v1920 = vrot.slane %v1919, 2
        %v1921 = vadd.f32 %v1919, %v1920
        %v1922 = vrot.slane %v1921, 1
        %v1923 = vadd.f32 %v1921, %v1922
        %v1924 = vmul.f32 %v1923, 0.02
        %v1925 = vld [vmem:[%s12] sm:$0x1]
        %v1926 = vadd.f32 %v1925, %v1186
        %v1927 = vadd.f32 %v1926, %v1879
        %v1928 = vld [vmem:[%s9] sm:$0xff]
        %v1929 = vld [vmem:[%s9 + $0x8] sm:$0xff]
        %v1930 = vld [vmem:[%s9 + $0x10] sm:$0xff]
        %v1931 = vld [vmem:[%s9 + $0x18] sm:$0xff]
        %v1933 = vsel %vm1883, %v1896, 0
        %1935 = vmatpush.msra.mxu0 0.0
        %1936 = vmatpush.msra.mxu0 0.0
        %1937 = vmatpush.msra.mxu0 0.0
        %1938 = vmatpush.msra.mxu0 0.0
        %1939 = vmatpush.msra.mxu0 0.0
        %1940 = vmatpush.msra.mxu0 0.0
        %1941 = vmatpush.msra.mxu0 0.0
        %1942 = vmatpush.msra.mxu0 0.0
        %1943 = vmatpush.msra.mxu0 0.0
        %1944 = vmatpush.msra.mxu0 0.0
        %1945 = vmatpush.msra.mxu0 0.0
        %1946 = vmatpush.msra.mxu0 0.0
        %1947 = vmatpush.msra.mxu0 %v1931
        %1948 = vmatpush.msra.mxu0 %v1930
        %1949 = vmatpush.msra.mxu0 %v1929
        %1950 = vmatpush.msra.mxu0 %v1928
        %1951 = vmatmul.f32.gmra.mxu0 %v1933
        %v1952 = vpop.f32.mrf.mxu0
        %v1953 = vadd.f32 0.0, %v1952
        %1954 = vdwg.mxu0
        %v1955 = vadd.f32 %v1927, %v1953
        %v1956 = vld [vmem:[%s10] sm:$0xff]
        %v1957 = vld [vmem:[%s10 + $0x8] sm:$0xff]
        %v1958 = vld [vmem:[%s10 + $0x10] sm:$0xff]
        %v1959 = vld [vmem:[%s10 + $0x18] sm:$0xff]
        %v1961 = vsel %vm1883, %v1924, 0
        %1963 = vmatpush.msra.mxu0 0.0
        %1964 = vmatpush.msra.mxu0 0.0
        %1965 = vmatpush.msra.mxu0 0.0
        %1966 = vmatpush.msra.mxu0 0.0
        %1967 = vmatpush.msra.mxu0 0.0
        %1968 = vmatpush.msra.mxu0 0.0
        %1969 = vmatpush.msra.mxu0 0.0
        %1970 = vmatpush.msra.mxu0 0.0
        %1971 = vmatpush.msra.mxu0 0.0
        %1972 = vmatpush.msra.mxu0 0.0
        %1973 = vmatpush.msra.mxu0 0.0
        %1974 = vmatpush.msra.mxu0 0.0
        %1975 = vmatpush.msra.mxu0 %v1959
        %1976 = vmatpush.msra.mxu0 %v1958
        %1977 = vmatpush.msra.mxu0 %v1957
        %1978 = vmatpush.msra.mxu0 %v1956
        %1979 = vmatmul.f32.gmra.mxu0 %v1961
        %v1980 = vpop.f32.mrf.mxu0
        %v1981 = vadd.f32 0.0, %v1980
        %1982 = vdwg.mxu0
        %v1983 = vadd.f32 %v1955, %v1981
        %v1984 = vld [vmem:[%s668] sm:$0x1]
        %v1985 = vld [vmem:[#allocation5] sm:$0xff]
        %v1986 = vld [vmem:[#allocation5 + $0x8] sm:$0xff]
        %v1987 = vld [vmem:[#allocation5 + $0x10] sm:$0xff]
        %vm1988 = vcmask 195584
        %v1990 = vsel %vm1988, %v1984, 0
        %1992 = vmatpush.msra.mxu0 0.0
        %1993 = vmatpush.msra.mxu0 0.0
        %1994 = vmatpush.msra.mxu0 0.0
        %1995 = vmatpush.msra.mxu0 0.0
        %1996 = vmatpush.msra.mxu0 0.0
        %1997 = vmatpush.msra.mxu0 0.0
        %1998 = vmatpush.msra.mxu0 0.0
        %1999 = vmatpush.msra.mxu0 0.0
        %2000 = vmatpush.msra.mxu0 0.0
        %2001 = vmatpush.msra.mxu0 0.0
        %2002 = vmatpush.msra.mxu0 0.0
        %2003 = vmatpush.msra.mxu0 0.0
        %2004 = vmatpush.msra.mxu0 0.0
        %2005 = vmatpush.msra.mxu0 %v1987
        %2006 = vmatpush.msra.mxu0 %v1986
        %2007 = vmatpush.msra.mxu0 %v1985
        %2008 = vmatmul.f32.gmra.mxu0 %v1990
        %v2009 = vpop.f32.mrf.mxu0
        %v2010 = vadd.f32 0.0, %v2009
        %2011 = vdwg.mxu0
        %v2012 = vadd.f32 %v1983, %v2010
        %v2013 = vmax.f32 %v2012, 0.0
        %v2014 = vld [vmem:[%s13] sm:$0xff]
        %v2015 = vld [vmem:[%s13 + $0x8] sm:$0xff]
        %v2016 = vld [vmem:[%s13 + $0x10] sm:$0xff]
        %v2017 = vld [vmem:[%s13 + $0x18] sm:$0xff]
        %v2018 = vld [vmem:[%s13 + $0x20] sm:$0xff]
        %v2019 = vld [vmem:[%s13 + $0x28] sm:$0xff]
        %v2020 = vld [vmem:[%s13 + $0x30] sm:$0xff]
        %v2021 = vld [vmem:[%s13 + $0x38] sm:$0xff]
        %v2022 = vld [vmem:[%s14] sm:$0x1]
        %vm2023 = vcmask 523264
        %v2025 = vsel %vm2023, %v2013, 0
        %2027 = vmatpush.msra.mxu0 0.0
        %2028 = vmatpush.msra.mxu0 0.0
        %2029 = vmatpush.msra.mxu0 0.0
        %2030 = vmatpush.msra.mxu0 0.0
        %2031 = vmatpush.msra.mxu0 0.0
        %2032 = vmatpush.msra.mxu0 0.0
        %2033 = vmatpush.msra.mxu0 0.0
        %2034 = vmatpush.msra.mxu0 0.0
        %2035 = vmatpush.msra.mxu0 %v2021
        %2036 = vmatpush.msra.mxu0 %v2020
        %2037 = vmatpush.msra.mxu0 %v2019
        %2038 = vmatpush.msra.mxu0 %v2018
        %2039 = vmatpush.msra.mxu0 %v2017
        %2040 = vmatpush.msra.mxu0 %v2016
        %2041 = vmatpush.msra.mxu0 %v2015
        %2042 = vmatpush.msra.mxu0 %v2014
        %2043 = vmatmul.f32.gmra.mxu0 %v2025
        %v2044 = vpop.f32.mrf.mxu0
        %v2045 = vadd.f32 %v2022, %v2044
        %2046 = vdwg.mxu0
        %2047 = vst [vmem:[%s631] sm:$0x1] %v2045
        %s2048 = sand.u32 %s382, 1
        %s2049 = scalar_lea.sflag [#allocation4], %s2048
        %s2050 = sand.u32 %s382, 1
        %s2051 = scalar_lea.vmem [#allocation7], %s2050
        %p2052 = scmp.lt.s32.totalorder %s34, 1
        %s2053 = scalar_select %p2052, %s34, 1
        %s2054 = smul.addr %s2053, 3
        %s2055 = smul.addr %s2054, 8
        %s2056 = scalar_lea.vmem %s16, %s2055
        %p2057 = scmp.lt.s32.totalorder %s34, 1
        %s2058 = scalar_select %p2057, %s34, 1
        %s2059 = smul.addr %s2058, 7
        %s2060 = smul.addr %s2059, 8
        %s2061 = scalar_lea.vmem %s17, %s2060
        // Predicated region
        $region89: #{custom_oligo_forward.1} parent=79 // pred_check
          %p2062 = pneg %p392
        $region90: #{custom_oligo_forward.1} parent=79 // pred_check_branch
          %2064 = sbr.rel (%p2062) target = $region92
        $region91: #{custom_oligo_forward.1} parent=79 // pred_region
          %2066 = vsyncadd %s2049, 0
          %s2067 = scalar_lea.hbm %s15, %s34
          %s2069 = sshll.u32 %s2051, 4
          %s2070 = int_to_ptr.vmem [resolvable:$true] %s2069
          %s2071 = sshll.u32 %s2067, 4
          %s2072 = int_to_ptr.hbm [resolvable:$true] %s2071
          %2074 = dma.vmem_to_hbm [thread:$0]  %s2070, 16, %s2072, %s2049
        $region92: #{custom_oligo_forward.1} parent=79 // pred_fallthru
          _
        // Predicated region
        $region93: #{custom_oligo_forward.1} parent=79 // pred_check
          %p2075 = pneg %p418
        $region94: #{custom_oligo_forward.1} parent=79 // pred_check_branch
          %2077 = sbr.rel (%p2075) target = $region96
        $region95: #{custom_oligo_forward.1} parent=79 // pred_region
          _
        $region96: #{custom_oligo_forward.1} parent=79 // pred_fallthru
          _
        // Predicated region
        $region97: #{custom_oligo_forward.1} parent=79 // pred_check
          %p2078 = pneg %p444
        $region98: #{custom_oligo_forward.1} parent=79 // pred_check_branch
          %2080 = sbr.rel (%p2078) target = $region100
        $region99: #{custom_oligo_forward.1} parent=79 // pred_region
          _
        $region100: #{custom_oligo_forward.1} parent=79 // pred_fallthru
          _
      $region80: #{custom_oligo_forward.1} parent=5 // pred_fallthru
        _
      %p2081 = scmp.le.s32.totalorder 2, %s29
      // Predicated region
      $region101: #{custom_oligo_forward.1} parent=5 // pred_check
        %p2082 = pneg %p2081
      $region102: #{custom_oligo_forward.1} parent=5 // pred_check_branch
        %2084 = sbr.rel (%p2082) target = $region104
      $region103: #{custom_oligo_forward.1} parent=5 // pred_region
        %s2085 = ssub.s32 %s29, 2
        // Predicated region
        $region105: #{custom_oligo_forward.1} parent=103 // pred_check
          %p2086 = pneg %p398
        $region106: #{custom_oligo_forward.1} parent=103 // pred_check_branch
          %2088 = sbr.rel (%p2086) target = $region108
        $region107: #{custom_oligo_forward.1} parent=103 // pred_region
          %s2089 = sand.u32 %s383, 1
          %s2090 = scalar_lea.sflag [#allocation4], %s2089
          %s2091 = sand.u32 %s383, 1
          %s2092 = scalar_lea.vmem [#allocation7], %s2091
          %2094 = dma.done %s2090, 16
        $region108: #{custom_oligo_forward.1} parent=103 // pred_fallthru
          _
        // Predicated region
        $region109: #{custom_oligo_forward.1} parent=103 // pred_check
          %p2095 = pneg %p424
        $region110: #{custom_oligo_forward.1} parent=103 // pred_check_branch
          %2097 = sbr.rel (%p2095) target = $region112
        $region111: #{custom_oligo_forward.1} parent=103 // pred_region
          %p2098 = scmp.lt.s32.totalorder %s35, 1
          %s2099 = scalar_select %p2098, %s35, 1
          %s2100 = smul.addr %s2099, 3
          %s2101 = smul.addr %s2100, 8
          %s2102 = scalar_lea.vmem %s16, %s2101
        $region112: #{custom_oligo_forward.1} parent=103 // pred_fallthru
          _
        // Predicated region
        $region113: #{custom_oligo_forward.1} parent=103 // pred_check
          %p2103 = pneg %p450
        $region114: #{custom_oligo_forward.1} parent=103 // pred_check_branch
          %2105 = sbr.rel (%p2103) target = $region116
        $region115: #{custom_oligo_forward.1} parent=103 // pred_region
          %p2106 = scmp.lt.s32.totalorder %s35, 1
          %s2107 = scalar_select %p2106, %s35, 1
          %s2108 = smul.addr %s2107, 7
          %s2109 = smul.addr %s2108, 8
          %s2110 = scalar_lea.vmem %s17, %s2109
        $region116: #{custom_oligo_forward.1} parent=103 // pred_fallthru
          _
      $region104: #{custom_oligo_forward.1} parent=5 // pred_fallthru
        _
    $region6: #{custom_oligo_forward.1} parent=1 // loop_footer
      %s33 = sadd.s32 1, %s29
    $region7: #{custom_oligo_forward.1} parent=1 // loop_footer_branch
      %28 = sbr.rel target = $region3
    $region8: #{custom_oligo_forward.1} parent=1 // loop_exit
      _
    %2111 = vsyncpa [#allocation3], 1
    %s2112 = scalar_lea.sflag [#allocation3], 1
    %2113 = vsyncpa %s2112, 1
    %2114 = vsyncpa [#allocation6], 1
    %2115 = vsyncpa [#allocation4], 1
    %s2116 = scalar_lea.sflag [#allocation4], 1
    %2117 = vsyncpa %s2116, 1

</llo_original>
